<compile_context>
chip_gen: v7x
topology: tpu7x:2x2x1
jax: 0.10.0
libtpu: 0.0.40
codegen_flags: <defaults>
</compile_context>

<pallas_src>
import math

import jax
import jax.numpy as jnp
from jax.experimental import pallas as pl
from jax.experimental.pallas import tpu as pltpu  # noqa: F401  (TPU backend)

# ---------------- model dims (small, synthetic) ----------------
B = 2          # batch
T = 8          # target (decoder) sequence length
S = 8          # source (memory) sequence length
D = 32         # d_model
H = 4          # heads
DK = D // H    # d_head
DFF = 64       # feed-forward hidden
EPS = 1e-6
SCALE = 1.0 / math.sqrt(DK)
NEG = -1e9     # plain Python float (never captured as a traced constant)

G = H * B      # number of (head, batch) diagonal blocks
BT = B * T
BS = B * S

F32 = jnp.float32


# ---------------- in-kernel relayout helpers (static, unrolled) ----------------
def _to_heads(y):
    """[B*L, H*DK] -> [H*B*L, DK]; row order (h, b, t). Pure lane-slice + sublane concat."""
    return jnp.concatenate([y[:, h * DK:(h + 1) * DK] for h in range(H)], axis=0)


def _from_heads(o):
    """[H*B*T, DK] -> [B*T, H*DK]; inverse of _to_heads for query-length rows."""
    return jnp.concatenate([o[h * BT:(h + 1) * BT, :] for h in range(H)], axis=1)


# ---------------- fused decoder-layer kernel (single invocation) ----------------
def _decoder_layer_kernel(
    x_ref, mem_ref, selfb_ref, crossb_ref,
    ln0g_ref, ln0b_ref, ln1g_ref, ln1b_ref, ln2g_ref, ln2b_ref,
    sa_wqkv_ref, sa_bqkv_ref, sa_wo_ref, sa_bo_ref,
    ca_wq_ref, ca_bq_ref, ca_wkv_ref, ca_bkv_ref, ca_wo_ref, ca_bo_ref,
    ff_w1_ref, ff_b1_ref, ff_w2_ref, ff_b2_ref,
    out_ref, attn_ref,
):
    x = x_ref[...]                      # [B*T, D]
    mem = mem_ref[...]                  # [B*S, D]
    self_bias = selfb_ref[...]          # [G*T, G*T] additive (0 keep / -1e9 mask)
    cross_bias = crossb_ref[...]        # [G*T, G*S]

    def layer_norm(v, g, b):
        mean = jnp.mean(v, axis=-1, keepdims=True)
        diff = v - mean
        var = jnp.sum(diff * diff, axis=-1, keepdims=True) * (1.0 / (D - 1))
        inv = pl.reciprocal(jnp.sqrt(var) + EPS, approx=True)   # torch-style unbiased std
        return g * diff * inv + b

    def attn_probs(qh, kht, bias):
        # qh: [G*T, DK], kht: [DK, G*L] (K pre-transposed once), bias additive.
        s = jnp.dot(qh, kht, preferred_element_type=jnp.float32) * SCALE + bias
        smax = jnp.max(s, axis=-1, keepdims=True)
        e = jnp.exp(s - smax)
        return e * pl.reciprocal(jnp.sum(e, axis=-1, keepdims=True), approx=True)

    # ---------- sublayer[0]: x + self_attn(LN0(x), LN0(x), LN0(x), tgt_mask) ----------
    nx = layer_norm(x, ln0g_ref[...], ln0b_ref[...])
    qkv = jnp.dot(nx, sa_wqkv_ref[...],
                  preferred_element_type=jnp.float32) + sa_bqkv_ref[...]     # [B*T, 3D]
    qr = _to_heads(qkv[:, :D])                   # [G*T, DK]
    krt = _to_heads(qkv[:, D:2 * D]).T           # [DK, G*T]  (transposed once)
    vr = _to_heads(qkv[:, 2 * D:])               # [G*T, DK]
    p = attn_probs(qr, krt, self_bias)           # [G*T, G*T] (block-diag)
    o = jnp.dot(p, vr, preferred_element_type=jnp.float32)                   # [G*T, DK]
    sa_out = jnp.dot(_from_heads(o), sa_wo_ref[...],
                     preferred_element_type=jnp.float32) + sa_bo_ref[...]    # [B*T, D]
    x = x + sa_out

    # ---------- cross-attention K/V from memory (computed once, reused) ----------
    kv_mem = jnp.dot(mem, ca_wkv_ref[...],
                     preferred_element_type=jnp.float32) + ca_bkv_ref[...]   # [B*S, 2D]
    krt_m = _to_heads(kv_mem[:, :D]).T           # [DK, G*S]
    vr_m = _to_heads(kv_mem[:, D:])              # [G*S, DK]

    # ---------- attn_dist = src_attn(x, m, m, src_mask)[1]  (probs only) ----------
    # NOTE: uses the *un-normalized* x after sublayer[0], matching the reference.
    q_dist = jnp.dot(x, ca_wq_ref[...],
                     preferred_element_type=jnp.float32) + ca_bq_ref[...]    # [B*T, D]
    p_dist = attn_probs(_to_heads(q_dist), krt_m, cross_bias)                # [G*T, G*S]
    # lane-dense store: [B*T, H*S], heads concatenated along lanes, one write.
    rows = []
    for b in range(B):
        per_h = []
        for h in range(H):
            g = h * B + b
            per_h.append(p_dist[g * T:(g + 1) * T, g * S:(g + 1) * S])       # [T, S]
        rows.append(jnp.concatenate(per_h, axis=1))                          # [T, H*S]
    attn_ref[...] = jnp.concatenate(rows, axis=0)                            # [B*T, H*S]

    # ---------- sublayer[1]: x + src_attn(LN1(x), m, m, src_mask) ----------
    nx = layer_norm(x, ln1g_ref[...], ln1b_ref[...])
    q_c = jnp.dot(nx, ca_wq_ref[...],
                  preferred_element_type=jnp.float32) + ca_bq_ref[...]       # [B*T, D]
    p_c = attn_probs(_to_heads(q_c), krt_m, cross_bias)                      # [G*T, G*S]
    o_c = jnp.dot(p_c, vr_m, preferred_element_type=jnp.float32)             # [G*T, DK]
    ca_out = jnp.dot(_from_heads(o_c), ca_wo_ref[...],
                     preferred_element_type=jnp.float32) + ca_bo_ref[...]    # [B*T, D]
    x = x + ca_out

    # ---------- sublayer[2]: x + FFN(LN2(x)) ----------
    nx = layer_norm(x, ln2g_ref[...], ln2b_ref[...])
    hdn = jnp.dot(nx, ff_w1_ref[...],
                  preferred_element_type=jnp.float32) + ff_b1_ref[...]
    hdn = jnp.maximum(hdn, 0.0)
    ff = jnp.dot(hdn, ff_w2_ref[...],
                 preferred_element_type=jnp.float32) + ff_b2_ref[...]
    out_ref[...] = x + ff


# ---------------- wrapper ----------------
def _block_bias(keep, Lq, Lk):
    """keep: [B, Lq, Lk] bool (True = attend).
    Returns [H*B*Lq, H*B*Lk] additive bias: 0 where same (head,batch) block AND
    attend-allowed, -1e9 everywhere else (built once in XLA, outside the kernel)."""
    R, C = H * B * Lq, H * B * Lk
    r = jnp.arange(R)
    c = jnp.arange(C)
    rh, rb, rt = r // (B * Lq), (r // Lq) % B, r % Lq
    ch, cb, cs = c // (B * Lk), (c // Lk) % B, c % Lk
    same = (rh[:, None] == ch[None, :]) & (rb[:, None] == cb[None, :])
    keep_rc = keep[rb[:, None], rt[:, None], cs[None, :]]
    return jnp.where(same & keep_rc, 0.0, NEG).astype(F32)


def decoder_layer(x, memory, src_mask, tgt_mask, params):
    """x:[B,T,D], memory:[B,S,D], src_mask:[B,1,S], tgt_mask:[B,T,T].
    Returns (out [B,T,D], attn_dist [B,H,T,S])."""
    x2 = x.reshape(BT, D)
    m2 = memory.reshape(BS, D)
    tgt_keep = jnp.broadcast_to(tgt_mask, (B, T, T)) != 0
    src_keep = jnp.broadcast_to(src_mask, (B, T, S)) != 0
    self_bias = _block_bias(tgt_keep, T, T)      # [G*T, G*T]
    cross_bias = _block_bias(src_keep, T, S)     # [G*T, G*S]

    # Grid-less single invocation: every operand is a whole-array VMEM block
    # (total resident footprint ~70 KiB, far under the VMEM limit on all gens).
    out2, attn_ld = pl.pallas_call(
        _decoder_layer_kernel,
        out_shape=(jax.ShapeDtypeStruct((BT, D), F32),
                   jax.ShapeDtypeStruct((BT, H * S), F32)),
    )(
        x2, m2, self_bias, cross_bias,
        params["ln0_g"], params["ln0_b"],
        params["ln1_g"], params["ln1_b"],
        params["ln2_g"], params["ln2_b"],
        params["sa_wqkv"], params["sa_bqkv"], params["sa_wo"], params["sa_bo"],
        params["ca_wq"], params["ca_bq"], params["ca_wkv"], params["ca_bkv"],
        params["ca_wo"], params["ca_bo"],
        params["ff_w1"], params["ff_b1"], params["ff_w2"], params["ff_b2"],
    )
    out = out2.reshape(B, T, D)
    attn = attn_ld.reshape(B, T, H, S).transpose(0, 2, 1, 3)
    return out, attn


# ---------------- pure-JAX reference (for correctness check) ----------------
def _reference(x, memory, src_mask, tgt_mask, p):
    def ln(v, g, b):
        mean = jnp.mean(v, axis=-1, keepdims=True)
        diff = v - mean
        var = jnp.sum(diff * diff, axis=-1, keepdims=True) / (D - 1)
        return g * diff / (jnp.sqrt(var) + EPS) + b

    def split_heads(y):  # [B, L, D] -> [B, H, L, DK]
        Bx, L, _ = y.shape
        return y.reshape(Bx, L, H, DK).transpose(0, 2, 1, 3)

    def mha(q_in, k_in, v_in, mask, wq, bq, wk, bk, wv, bv, wo, bo):
        q = split_heads(q_in @ wq + bq)
        k = split_heads(k_in @ wk + bk)
        v = split_heads(v_in @ wv + bv)
        s = jnp.einsum("bhtd,bhsd->bhts", q, k) * SCALE
        s = jnp.where(mask[:, None, :, :] == 0.0, -1e9, s)
        p_attn = jax.nn.softmax(s, axis=-1)
        o = jnp.einsum("bhts,bhsd->bhtd", p_attn, v)
        Bx, _, L, _ = o.shape
        o = o.transpose(0, 2, 1, 3).reshape(Bx, L, D)
        return o @ wo + bo, p_attn

    sa_wq, sa_wk, sa_wv = (p["sa_wqkv"][:, :D], p["sa_wqkv"][:, D:2 * D],
                           p["sa_wqkv"][:, 2 * D:])
    sa_bq, sa_bk, sa_bv = (p["sa_bqkv"][:, :D], p["sa_bqkv"][:, D:2 * D],
                           p["sa_bqkv"][:, 2 * D:])
    ca_wk, ca_wv = p["ca_wkv"][:, :D], p["ca_wkv"][:, D:]
    ca_bk, ca_bv = p["ca_bkv"][:, :D], p["ca_bkv"][:, D:]

    tgt_b = jnp.broadcast_to(tgt_mask, (B, T, T))
    src_b = jnp.broadcast_to(src_mask, (B, T, S))

    m = memory
    nx = ln(x, p["ln0_g"], p["ln0_b"])
    sa, _ = mha(nx, nx, nx, tgt_b, sa_wq, sa_bq, sa_wk, sa_bk, sa_wv, sa_bv,
                p["sa_wo"], p["sa_bo"])
    x = x + sa
    _, attn_dist = mha(x, m, m, src_b, p["ca_wq"], p["ca_bq"], ca_wk, ca_bk,
                       ca_wv, ca_bv, p["ca_wo"], p["ca_bo"])
    nx = ln(x, p["ln1_g"], p["ln1_b"])
    ca, _ = mha(nx, m, m, src_b, p["ca_wq"], p["ca_bq"], ca_wk, ca_bk,
                ca_wv, ca_bv, p["ca_wo"], p["ca_bo"])
    x = x + ca
    nx = ln(x, p["ln2_g"], p["ln2_b"])
    ff = jnp.maximum(nx @ p["ff_w1"] + p["ff_b1"], 0.0) @ p["ff_w2"] + p["ff_b2"]
    return x + ff, attn_dist


# ---------------- deterministic parameter init ----------------
def init_params(key):
    ks = jax.random.split(key, 14)

    def w(k, din, dout):
        return 0.1 * jax.random.normal(k, (din, dout), F32)

    def bias(k, dout):
        return 0.02 * jax.random.normal(k, (1, dout), F32)

    return dict(
        ln0_g=jnp.ones((1, D), F32), ln0_b=jnp.zeros((1, D), F32),
        ln1_g=jnp.ones((1, D), F32), ln1_b=jnp.zeros((1, D), F32),
        ln2_g=jnp.ones((1, D), F32), ln2_b=jnp.zeros((1, D), F32),
        sa_wqkv=w(ks[0], D, 3 * D), sa_bqkv=bias(ks[1], 3 * D),
        sa_wo=w(ks[2], D, D),       sa_bo=bias(ks[3], D),
        ca_wq=w(ks[4], D, D),       ca_bq=bias(ks[5], D),
        ca_wkv=w(ks[6], D, 2 * D),  ca_bkv=bias(ks[7], 2 * D),
        ca_wo=w(ks[8], D, D),       ca_bo=bias(ks[9], D),
        ff_w1=w(ks[10], D, DFF),    ff_b1=bias(ks[11], DFF),
        ff_w2=w(ks[12], DFF, D),    ff_b2=bias(ks[13], D),
    )


if __name__ == "__main__":
    key = jax.random.PRNGKey(0)
    kx, km, kp = jax.random.split(key, 3)

    x = jax.random.normal(kx, (B, T, D), F32)            # decoder input
    memory = jax.random.normal(km, (B, S, D), F32)       # encoder memory
    src_mask = jnp.ones((B, 1, S), F32)                  # all source positions valid
    tgt_mask = jnp.broadcast_to(jnp.tril(jnp.ones((T, T), F32)), (B, T, T))  # causal

    params = init_params(kp)

    out, attn_dist = decoder_layer(x, memory, src_mask, tgt_mask, params)
    out = jax.block_until_ready(out)
    attn_dist = jax.block_until_ready(attn_dist)

    assert out.shape == (B, T, D)
    assert attn_dist.shape == (B, H, T, S)
    assert bool(jnp.all(jnp.isfinite(out)))
    # attention rows must sum to ~1 (approx-reciprocal softmax denominator)
    assert bool(jnp.allclose(jnp.sum(attn_dist, axis=-1), 1.0, atol=5e-3))

    # cross-check against a pure-JAX reference of the same math
    with jax.default_matmul_precision("highest"):
        ref_out, ref_attn = _reference(x, memory, src_mask, tgt_mask, params)
    assert bool(jnp.allclose(out, ref_out, atol=3e-2, rtol=3e-2))
    assert bool(jnp.allclose(attn_dist, ref_attn, atol=3e-2, rtol=3e-2))

    print("KERNEL_OK")
</pallas_src>

<mosaic_0001>
module attributes {stable_mosaic.version = 11 : i64} {
  func.func @_decoder_layer_kernel(%arg0: memref<16x32xf32, #tpu.memory_space<vmem>>, %arg1: memref<16x32xf32, #tpu.memory_space<vmem>>, %arg2: memref<64x64xf32, #tpu.memory_space<vmem>>, %arg3: memref<64x64xf32, #tpu.memory_space<vmem>>, %arg4: memref<1x32xf32, #tpu.memory_space<vmem>>, %arg5: memref<1x32xf32, #tpu.memory_space<vmem>>, %arg6: memref<1x32xf32, #tpu.memory_space<vmem>>, %arg7: memref<1x32xf32, #tpu.memory_space<vmem>>, %arg8: memref<1x32xf32, #tpu.memory_space<vmem>>, %arg9: memref<1x32xf32, #tpu.memory_space<vmem>>, %arg10: memref<32x96xf32, #tpu.memory_space<vmem>>, %arg11: memref<1x96xf32, #tpu.memory_space<vmem>>, %arg12: memref<32x32xf32, #tpu.memory_space<vmem>>, %arg13: memref<1x32xf32, #tpu.memory_space<vmem>>, %arg14: memref<32x32xf32, #tpu.memory_space<vmem>>, %arg15: memref<1x32xf32, #tpu.memory_space<vmem>>, %arg16: memref<32x64xf32, #tpu.memory_space<vmem>>, %arg17: memref<1x64xf32, #tpu.memory_space<vmem>>, %arg18: memref<32x32xf32, #tpu.memory_space<vmem>>, %arg19: memref<1x32xf32, #tpu.memory_space<vmem>>, %arg20: memref<32x64xf32, #tpu.memory_space<vmem>>, %arg21: memref<1x64xf32, #tpu.memory_space<vmem>>, %arg22: memref<64x32xf32, #tpu.memory_space<vmem>>, %arg23: memref<1x32xf32, #tpu.memory_space<vmem>>, %arg24: memref<16x32xf32, #tpu.memory_space<vmem>>, %arg25: memref<16x32xf32, #tpu.memory_space<vmem>>) attributes {dimension_semantics = [], scalar_prefetch = 0 : i64, scratch_operands = 0 : i64, tpu.core_type = #tpu.core_type<tc>} {
    %c0 = arith.constant 0 : index
    %c0_0 = arith.constant 0 : index
    %0 = vector.load %arg0[%c0, %c0_0] : memref<16x32xf32, #tpu.memory_space<vmem>>, vector<16x32xf32>
    %c0_1 = arith.constant 0 : index
    %c0_2 = arith.constant 0 : index
    %1 = vector.load %arg1[%c0_1, %c0_2] : memref<16x32xf32, #tpu.memory_space<vmem>>, vector<16x32xf32>
    %c0_3 = arith.constant 0 : index
    %c0_4 = arith.constant 0 : index
    %2 = vector.load %arg2[%c0_3, %c0_4] : memref<64x64xf32, #tpu.memory_space<vmem>>, vector<64x64xf32>
    %c0_5 = arith.constant 0 : index
    %c0_6 = arith.constant 0 : index
    %3 = vector.load %arg3[%c0_5, %c0_6] : memref<64x64xf32, #tpu.memory_space<vmem>>, vector<64x64xf32>
    %c0_7 = arith.constant 0 : index
    %c0_8 = arith.constant 0 : index
    %4 = vector.load %arg4[%c0_7, %c0_8] : memref<1x32xf32, #tpu.memory_space<vmem>>, vector<1x32xf32>
    %c0_9 = arith.constant 0 : index
    %c0_10 = arith.constant 0 : index
    %5 = vector.load %arg5[%c0_9, %c0_10] : memref<1x32xf32, #tpu.memory_space<vmem>>, vector<1x32xf32>
    %cst = arith.constant dense<0.000000e+00> : vector<16xf32>
    %6 = vector.multi_reduction <add>, %0, %cst [1] : vector<16x32xf32> to vector<16xf32>
    %7 = vector.shape_cast %6 : vector<16xf32> to vector<16x1xf32>
    %cst_11 = arith.constant 3.200000e+01 : f32
    %8 = vector.broadcast %cst_11 : f32 to vector<16x1xf32>
    %9 = arith.divf %7, %8 : vector<16x1xf32>
    %10 = vector.broadcast %9 : vector<16x1xf32> to vector<16x32xf32>
    %11 = arith.subf %0, %10 : vector<16x32xf32>
    %12 = arith.mulf %11, %11 : vector<16x32xf32>
    %cst_12 = arith.constant dense<0.000000e+00> : vector<16xf32>
    %13 = vector.multi_reduction <add>, %12, %cst_12 [1] : vector<16x32xf32> to vector<16xf32>
    %14 = vector.shape_cast %13 : vector<16xf32> to vector<16x1xf32>
    %cst_13 = arith.constant 0.0322580636 : f32
    %15 = vector.broadcast %cst_13 : f32 to vector<16x1xf32>
    %16 = arith.mulf %14, %15 : vector<16x1xf32>
    %17 = math.sqrt %16 : vector<16x1xf32>
    %cst_14 = arith.constant 9.99999997E-7 : f32
    %18 = vector.broadcast %cst_14 : f32 to vector<16x1xf32>
    %19 = arith.addf %17, %18 : vector<16x1xf32>
    %20 = tpu.reciprocal %19 {approx = true} : vector<16x1xf32> -> vector<16x1xf32>
    %21 = vector.broadcast %4 : vector<1x32xf32> to vector<16x32xf32>
    %22 = arith.mulf %21, %11 : vector<16x32xf32>
    %23 = vector.broadcast %20 : vector<16x1xf32> to vector<16x32xf32>
    %24 = arith.mulf %22, %23 : vector<16x32xf32>
    %25 = vector.broadcast %5 : vector<1x32xf32> to vector<16x32xf32>
    %26 = arith.addf %24, %25 : vector<16x32xf32>
    %c0_15 = arith.constant 0 : index
    %c0_16 = arith.constant 0 : index
    %27 = vector.load %arg10[%c0_15, %c0_16] : memref<32x96xf32, #tpu.memory_space<vmem>>, vector<32x96xf32>
    %cst_17 = arith.constant dense<0.000000e+00> : vector<16x96xf32>
    %28 = tpu.matmul %26, %27, %cst_17 {dimension_numbers = #tpu.dot_dimension_numbers<[1], [0], [0], [1], [0, 0, 1, 1], [], []>} : vector<16x32xf32>, vector<32x96xf32>, vector<16x96xf32> -> vector<16x96xf32>
    %c0_18 = arith.constant 0 : index
    %c0_19 = arith.constant 0 : index
    %29 = vector.load %arg11[%c0_18, %c0_19] : memref<1x96xf32, #tpu.memory_space<vmem>>, vector<1x96xf32>
    %30 = vector.broadcast %29 : vector<1x96xf32> to vector<16x96xf32>
    %31 = arith.addf %28, %30 : vector<16x96xf32>
    %32 = vector.extract_strided_slice %31 {offsets = [0, 0], sizes = [16, 32], strides = [1, 1]} : vector<16x96xf32> to vector<16x32xf32>
    %33 = vector.extract_strided_slice %32 {offsets = [0, 0], sizes = [16, 8], strides = [1, 1]} : vector<16x32xf32> to vector<16x8xf32>
    %34 = vector.extract_strided_slice %32 {offsets = [0, 8], sizes = [16, 8], strides = [1, 1]} : vector<16x32xf32> to vector<16x8xf32>
    %35 = vector.extract_strided_slice %32 {offsets = [0, 16], sizes = [16, 8], strides = [1, 1]} : vector<16x32xf32> to vector<16x8xf32>
    %36 = vector.extract_strided_slice %32 {offsets = [0, 24], sizes = [16, 8], strides = [1, 1]} : vector<16x32xf32> to vector<16x8xf32>
    %37 = tpu.concatenate %33, %34, %35, %36 in 0 : vector<16x8xf32>, vector<16x8xf32>, vector<16x8xf32>, vector<16x8xf32> -> vector<64x8xf32>
    %38 = vector.extract_strided_slice %31 {offsets = [0, 32], sizes = [16, 32], strides = [1, 1]} : vector<16x96xf32> to vector<16x32xf32>
    %39 = vector.extract_strided_slice %38 {offsets = [0, 0], sizes = [16, 8], strides = [1, 1]} : vector<16x32xf32> to vector<16x8xf32>
    %40 = vector.extract_strided_slice %38 {offsets = [0, 8], sizes = [16, 8], strides = [1, 1]} : vector<16x32xf32> to vector<16x8xf32>
    %41 = vector.extract_strided_slice %38 {offsets = [0, 16], sizes = [16, 8], strides = [1, 1]} : vector<16x32xf32> to vector<16x8xf32>
    %42 = vector.extract_strided_slice %38 {offsets = [0, 24], sizes = [16, 8], strides = [1, 1]} : vector<16x32xf32> to vector<16x8xf32>
    %43 = tpu.concatenate %39, %40, %41, %42 in 0 : vector<16x8xf32>, vector<16x8xf32>, vector<16x8xf32>, vector<16x8xf32> -> vector<64x8xf32>
    %44 = tpu.transpose %43, [1, 0] : vector<64x8xf32> -> vector<8x64xf32>
    %45 = vector.extract_strided_slice %31 {offsets = [0, 64], sizes = [16, 32], strides = [1, 1]} : vector<16x96xf32> to vector<16x32xf32>
    %46 = vector.extract_strided_slice %45 {offsets = [0, 0], sizes = [16, 8], strides = [1, 1]} : vector<16x32xf32> to vector<16x8xf32>
    %47 = vector.extract_strided_slice %45 {offsets = [0, 8], sizes = [16, 8], strides = [1, 1]} : vector<16x32xf32> to vector<16x8xf32>
    %48 = vector.extract_strided_slice %45 {offsets = [0, 16], sizes = [16, 8], strides = [1, 1]} : vector<16x32xf32> to vector<16x8xf32>
    %49 = vector.extract_strided_slice %45 {offsets = [0, 24], sizes = [16, 8], strides = [1, 1]} : vector<16x32xf32> to vector<16x8xf32>
    %50 = tpu.concatenate %46, %47, %48, %49 in 0 : vector<16x8xf32>, vector<16x8xf32>, vector<16x8xf32>, vector<16x8xf32> -> vector<64x8xf32>
    %cst_20 = arith.constant dense<0.000000e+00> : vector<64x64xf32>
    %51 = tpu.matmul %37, %44, %cst_20 {dimension_numbers = #tpu.dot_dimension_numbers<[1], [0], [0], [1], [0, 0, 1, 1], [], []>} : vector<64x8xf32>, vector<8x64xf32>, vector<64x64xf32> -> vector<64x64xf32>
    %cst_21 = arith.constant 0.353553385 : f32
    %52 = vector.broadcast %cst_21 : f32 to vector<64x64xf32>
    %53 = arith.mulf %51, %52 : vector<64x64xf32>
    %54 = arith.addf %53, %2 : vector<64x64xf32>
    %cst_22 = arith.constant dense<0xFF800000> : vector<64xf32>
    %55 = vector.multi_reduction <maximumf>, %54, %cst_22 [1] : vector<64x64xf32> to vector<64xf32>
    %56 = vector.shape_cast %55 : vector<64xf32> to vector<64x1xf32>
    %57 = vector.broadcast %56 : vector<64x1xf32> to vector<64x64xf32>
    %58 = arith.subf %54, %57 : vector<64x64xf32>
    %59 = math.exp %58 : vector<64x64xf32>
    %cst_23 = arith.constant dense<0.000000e+00> : vector<64xf32>
    %60 = vector.multi_reduction <add>, %59, %cst_23 [1] : vector<64x64xf32> to vector<64xf32>
    %61 = vector.shape_cast %60 : vector<64xf32> to vector<64x1xf32>
    %62 = tpu.reciprocal %61 {approx = true} : vector<64x1xf32> -> vector<64x1xf32>
    %63 = vector.broadcast %62 : vector<64x1xf32> to vector<64x64xf32>
    %64 = arith.mulf %59, %63 : vector<64x64xf32>
    %cst_24 = arith.constant dense<0.000000e+00> : vector<64x8xf32>
    %65 = tpu.matmul %64, %50, %cst_24 {dimension_numbers = #tpu.dot_dimension_numbers<[1], [0], [0], [1], [0, 0, 1, 1], [], []>} : vector<64x64xf32>, vector<64x8xf32>, vector<64x8xf32> -> vector<64x8xf32>
    %66 = vector.extract_strided_slice %65 {offsets = [0, 0], sizes = [16, 8], strides = [1, 1]} : vector<64x8xf32> to vector<16x8xf32>
    %67 = vector.extract_strided_slice %65 {offsets = [16, 0], sizes = [16, 8], strides = [1, 1]} : vector<64x8xf32> to vector<16x8xf32>
    %68 = vector.extract_strided_slice %65 {offsets = [32, 0], sizes = [16, 8], strides = [1, 1]} : vector<64x8xf32> to vector<16x8xf32>
    %69 = vector.extract_strided_slice %65 {offsets = [48, 0], sizes = [16, 8], strides = [1, 1]} : vector<64x8xf32> to vector<16x8xf32>
    %70 = tpu.concatenate %66, %67, %68, %69 in 1 : vector<16x8xf32>, vector<16x8xf32>, vector<16x8xf32>, vector<16x8xf32> -> vector<16x32xf32>
    %c0_25 = arith.constant 0 : index
    %c0_26 = arith.constant 0 : index
    %71 = vector.load %arg12[%c0_25, %c0_26] : memref<32x32xf32, #tpu.memory_space<vmem>>, vector<32x32xf32>
    %cst_27 = arith.constant dense<0.000000e+00> : vector<16x32xf32>
    %72 = tpu.matmul %70, %71, %cst_27 {dimension_numbers = #tpu.dot_dimension_numbers<[1], [0], [0], [1], [0, 0, 1, 1], [], []>} : vector<16x32xf32>, vector<32x32xf32>, vector<16x32xf32> -> vector<16x32xf32>
    %c0_28 = arith.constant 0 : index
    %c0_29 = arith.constant 0 : index
    %73 = vector.load %arg13[%c0_28, %c0_29] : memref<1x32xf32, #tpu.memory_space<vmem>>, vector<1x32xf32>
    %74 = vector.broadcast %73 : vector<1x32xf32> to vector<16x32xf32>
    %75 = arith.addf %72, %74 : vector<16x32xf32>
    %76 = arith.addf %0, %75 : vector<16x32xf32>
    %c0_30 = arith.constant 0 : index
    %c0_31 = arith.constant 0 : index
    %77 = vector.load %arg16[%c0_30, %c0_31] : memref<32x64xf32, #tpu.memory_space<vmem>>, vector<32x64xf32>
    %cst_32 = arith.constant dense<0.000000e+00> : vector<16x64xf32>
    %78 = tpu.matmul %1, %77, %cst_32 {dimension_numbers = #tpu.dot_dimension_numbers<[1], [0], [0], [1], [0, 0, 1, 1], [], []>} : vector<16x32xf32>, vector<32x64xf32>, vector<16x64xf32> -> vector<16x64xf32>
    %c0_33 = arith.constant 0 : index
    %c0_34 = arith.constant 0 : index
    %79 = vector.load %arg17[%c0_33, %c0_34] : memref<1x64xf32, #tpu.memory_space<vmem>>, vector<1x64xf32>
    %80 = vector.broadcast %79 : vector<1x64xf32> to vector<16x64xf32>
    %81 = arith.addf %78, %80 : vector<16x64xf32>
    %82 = vector.extract_strided_slice %81 {offsets = [0, 0], sizes = [16, 32], strides = [1, 1]} : vector<16x64xf32> to vector<16x32xf32>
    %83 = vector.extract_strided_slice %82 {offsets = [0, 0], sizes = [16, 8], strides = [1, 1]} : vector<16x32xf32> to vector<16x8xf32>
    %84 = vector.extract_strided_slice %82 {offsets = [0, 8], sizes = [16, 8], strides = [1, 1]} : vector<16x32xf32> to vector<16x8xf32>
    %85 = vector.extract_strided_slice %82 {offsets = [0, 16], sizes = [16, 8], strides = [1, 1]} : vector<16x32xf32> to vector<16x8xf32>
    %86 = vector.extract_strided_slice %82 {offsets = [0, 24], sizes = [16, 8], strides = [1, 1]} : vector<16x32xf32> to vector<16x8xf32>
    %87 = tpu.concatenate %83, %84, %85, %86 in 0 : vector<16x8xf32>, vector<16x8xf32>, vector<16x8xf32>, vector<16x8xf32> -> vector<64x8xf32>
    %88 = tpu.transpose %87, [1, 0] : vector<64x8xf32> -> vector<8x64xf32>
    %89 = vector.extract_strided_slice %81 {offsets = [0, 32], sizes = [16, 32], strides = [1, 1]} : vector<16x64xf32> to vector<16x32xf32>
    %90 = vector.extract_strided_slice %89 {offsets = [0, 0], sizes = [16, 8], strides = [1, 1]} : vector<16x32xf32> to vector<16x8xf32>
    %91 = vector.extract_strided_slice %89 {offsets = [0, 8], sizes = [16, 8], strides = [1, 1]} : vector<16x32xf32> to vector<16x8xf32>
    %92 = vector.extract_strided_slice %89 {offsets = [0, 16], sizes = [16, 8], strides = [1, 1]} : vector<16x32xf32> to vector<16x8xf32>
    %93 = vector.extract_strided_slice %89 {offsets = [0, 24], sizes = [16, 8], strides = [1, 1]} : vector<16x32xf32> to vector<16x8xf32>
    %94 = tpu.concatenate %90, %91, %92, %93 in 0 : vector<16x8xf32>, vector<16x8xf32>, vector<16x8xf32>, vector<16x8xf32> -> vector<64x8xf32>
    %c0_35 = arith.constant 0 : index
    %c0_36 = arith.constant 0 : index
    %95 = vector.load %arg14[%c0_35, %c0_36] : memref<32x32xf32, #tpu.memory_space<vmem>>, vector<32x32xf32>
    %cst_37 = arith.constant dense<0.000000e+00> : vector<16x32xf32>
    %96 = tpu.matmul %76, %95, %cst_37 {dimension_numbers = #tpu.dot_dimension_numbers<[1], [0], [0], [1], [0, 0, 1, 1], [], []>} : vector<16x32xf32>, vector<32x32xf32>, vector<16x32xf32> -> vector<16x32xf32>
    %c0_38 = arith.constant 0 : index
    %c0_39 = arith.constant 0 : index
    %97 = vector.load %arg15[%c0_38, %c0_39] : memref<1x32xf32, #tpu.memory_space<vmem>>, vector<1x32xf32>
    %98 = vector.broadcast %97 : vector<1x32xf32> to vector<16x32xf32>
    %99 = arith.addf %96, %98 : vector<16x32xf32>
    %100 = vector.extract_strided_slice %99 {offsets = [0, 0], sizes = [16, 8], strides = [1, 1]} : vector<16x32xf32> to vector<16x8xf32>
    %101 = vector.extract_strided_slice %99 {offsets = [0, 8], sizes = [16, 8], strides = [1, 1]} : vector<16x32xf32> to vector<16x8xf32>
    %102 = vector.extract_strided_slice %99 {offsets = [0, 16], sizes = [16, 8], strides = [1, 1]} : vector<16x32xf32> to vector<16x8xf32>
    %103 = vector.extract_strided_slice %99 {offsets = [0, 24], sizes = [16, 8], strides = [1, 1]} : vector<16x32xf32> to vector<16x8xf32>
    %104 = tpu.concatenate %100, %101, %102, %103 in 0 : vector<16x8xf32>, vector<16x8xf32>, vector<16x8xf32>, vector<16x8xf32> -> vector<64x8xf32>
    %cst_40 = arith.constant dense<0.000000e+00> : vector<64x64xf32>
    %105 = tpu.matmul %104, %88, %cst_40 {dimension_numbers = #tpu.dot_dimension_numbers<[1], [0], [0], [1], [0, 0, 1, 1], [], []>} : vector<64x8xf32>, vector<8x64xf32>, vector<64x64xf32> -> vector<64x64xf32>
    %cst_41 = arith.constant 0.353553385 : f32
    %106 = vector.broadcast %cst_41 : f32 to vector<64x64xf32>
    %107 = arith.mulf %105, %106 : vector<64x64xf32>
    %108 = arith.addf %107, %3 : vector<64x64xf32>
    %cst_42 = arith.constant dense<0xFF800000> : vector<64xf32>
    %109 = vector.multi_reduction <maximumf>, %108, %cst_42 [1] : vector<64x64xf32> to vector<64xf32>
    %110 = vector.shape_cast %109 : vector<64xf32> to vector<64x1xf32>
    %111 = vector.broadcast %110 : vector<64x1xf32> to vector<64x64xf32>
    %112 = arith.subf %108, %111 : vector<64x64xf32>
    %113 = math.exp %112 : vector<64x64xf32>
    %cst_43 = arith.constant dense<0.000000e+00> : vector<64xf32>
    %114 = vector.multi_reduction <add>, %113, %cst_43 [1] : vector<64x64xf32> to vector<64xf32>
    %115 = vector.shape_cast %114 : vector<64xf32> to vector<64x1xf32>
    %116 = tpu.reciprocal %115 {approx = true} : vector<64x1xf32> -> vector<64x1xf32>
    %117 = vector.broadcast %116 : vector<64x1xf32> to vector<64x64xf32>
    %118 = arith.mulf %113, %117 : vector<64x64xf32>
    %119 = vector.extract_strided_slice %118 {offsets = [0, 0], sizes = [8, 8], strides = [1, 1]} : vector<64x64xf32> to vector<8x8xf32>
    %120 = vector.extract_strided_slice %118 {offsets = [16, 16], sizes = [8, 8], strides = [1, 1]} : vector<64x64xf32> to vector<8x8xf32>
    %121 = vector.extract_strided_slice %118 {offsets = [32, 32], sizes = [8, 8], strides = [1, 1]} : vector<64x64xf32> to vector<8x8xf32>
    %122 = vector.extract_strided_slice %118 {offsets = [48, 48], sizes = [8, 8], strides = [1, 1]} : vector<64x64xf32> to vector<8x8xf32>
    %123 = tpu.concatenate %119, %120, %121, %122 in 1 : vector<8x8xf32>, vector<8x8xf32>, vector<8x8xf32>, vector<8x8xf32> -> vector<8x32xf32>
    %124 = vector.extract_strided_slice %118 {offsets = [8, 8], sizes = [8, 8], strides = [1, 1]} : vector<64x64xf32> to vector<8x8xf32>
    %125 = vector.extract_strided_slice %118 {offsets = [24, 24], sizes = [8, 8], strides = [1, 1]} : vector<64x64xf32> to vector<8x8xf32>
    %126 = vector.extract_strided_slice %118 {offsets = [40, 40], sizes = [8, 8], strides = [1, 1]} : vector<64x64xf32> to vector<8x8xf32>
    %127 = vector.extract_strided_slice %118 {offsets = [56, 56], sizes = [8, 8], strides = [1, 1]} : vector<64x64xf32> to vector<8x8xf32>
    %128 = tpu.concatenate %124, %125, %126, %127 in 1 : vector<8x8xf32>, vector<8x8xf32>, vector<8x8xf32>, vector<8x8xf32> -> vector<8x32xf32>
    %129 = tpu.concatenate %123, %128 in 0 : vector<8x32xf32>, vector<8x32xf32> -> vector<16x32xf32>
    %c0_44 = arith.constant 0 : index
    %c0_45 = arith.constant 0 : index
    %130 = vector.load %arg25[%c0_44, %c0_45] : memref<16x32xf32, #tpu.memory_space<vmem>>, vector<16x32xf32>
    tpu.vector_store %arg25[%c0_44, %c0_45], %129 {strides = array<i32>} : memref<16x32xf32, #tpu.memory_space<vmem>>, vector<16x32xf32>,
    %c0_46 = arith.constant 0 : index
    %c0_47 = arith.constant 0 : index
    %131 = vector.load %arg6[%c0_46, %c0_47] : memref<1x32xf32, #tpu.memory_space<vmem>>, vector<1x32xf32>
    %c0_48 = arith.constant 0 : index
    %c0_49 = arith.constant 0 : index
    %132 = vector.load %arg7[%c0_48, %c0_49] : memref<1x32xf32, #tpu.memory_space<vmem>>, vector<1x32xf32>
    %cst_50 = arith.constant dense<0.000000e+00> : vector<16xf32>
    %133 = vector.multi_reduction <add>, %76, %cst_50 [1] : vector<16x32xf32> to vector<16xf32>
    %134 = vector.shape_cast %133 : vector<16xf32> to vector<16x1xf32>
    %cst_51 = arith.constant 3.200000e+01 : f32
    %135 = vector.broadcast %cst_51 : f32 to vector<16x1xf32>
    %136 = arith.divf %134, %135 : vector<16x1xf32>
    %137 = vector.broadcast %136 : vector<16x1xf32> to vector<16x32xf32>
    %138 = arith.subf %76, %137 : vector<16x32xf32>
    %139 = arith.mulf %138, %138 : vector<16x32xf32>
    %cst_52 = arith.constant dense<0.000000e+00> : vector<16xf32>
    %140 = vector.multi_reduction <add>, %139, %cst_52 [1] : vector<16x32xf32> to vector<16xf32>
    %141 = vector.shape_cast %140 : vector<16xf32> to vector<16x1xf32>
    %cst_53 = arith.constant 0.0322580636 : f32
    %142 = vector.broadcast %cst_53 : f32 to vector<16x1xf32>
    %143 = arith.mulf %141, %142 : vector<16x1xf32>
    %144 = math.sqrt %143 : vector<16x1xf32>
    %cst_54 = arith.constant 9.99999997E-7 : f32
    %145 = vector.broadcast %cst_54 : f32 to vector<16x1xf32>
    %146 = arith.addf %144, %145 : vector<16x1xf32>
    %147 = tpu.reciprocal %146 {approx = true} : vector<16x1xf32> -> vector<16x1xf32>
    %148 = vector.broadcast %131 : vector<1x32xf32> to vector<16x32xf32>
    %149 = arith.mulf %148, %138 : vector<16x32xf32>
    %150 = vector.broadcast %147 : vector<16x1xf32> to vector<16x32xf32>
    %151 = arith.mulf %149, %150 : vector<16x32xf32>
    %152 = vector.broadcast %132 : vector<1x32xf32> to vector<16x32xf32>
    %153 = arith.addf %151, %152 : vector<16x32xf32>
    %c0_55 = arith.constant 0 : index
    %c0_56 = arith.constant 0 : index
    %154 = vector.load %arg14[%c0_55, %c0_56] : memref<32x32xf32, #tpu.memory_space<vmem>>, vector<32x32xf32>
    %cst_57 = arith.constant dense<0.000000e+00> : vector<16x32xf32>
    %155 = tpu.matmul %153, %154, %cst_57 {dimension_numbers = #tpu.dot_dimension_numbers<[1], [0], [0], [1], [0, 0, 1, 1], [], []>} : vector<16x32xf32>, vector<32x32xf32>, vector<16x32xf32> -> vector<16x32xf32>
    %c0_58 = arith.constant 0 : index
    %c0_59 = arith.constant 0 : index
    %156 = vector.load %arg15[%c0_58, %c0_59] : memref<1x32xf32, #tpu.memory_space<vmem>>, vector<1x32xf32>
    %157 = vector.broadcast %156 : vector<1x32xf32> to vector<16x32xf32>
    %158 = arith.addf %155, %157 : vector<16x32xf32>
    %159 = vector.extract_strided_slice %158 {offsets = [0, 0], sizes = [16, 8], strides = [1, 1]} : vector<16x32xf32> to vector<16x8xf32>
    %160 = vector.extract_strided_slice %158 {offsets = [0, 8], sizes = [16, 8], strides = [1, 1]} : vector<16x32xf32> to vector<16x8xf32>
    %161 = vector.extract_strided_slice %158 {offsets = [0, 16], sizes = [16, 8], strides = [1, 1]} : vector<16x32xf32> to vector<16x8xf32>
    %162 = vector.extract_strided_slice %158 {offsets = [0, 24], sizes = [16, 8], strides = [1, 1]} : vector<16x32xf32> to vector<16x8xf32>
    %163 = tpu.concatenate %159, %160, %161, %162 in 0 : vector<16x8xf32>, vector<16x8xf32>, vector<16x8xf32>, vector<16x8xf32> -> vector<64x8xf32>
    %cst_60 = arith.constant dense<0.000000e+00> : vector<64x64xf32>
    %164 = tpu.matmul %163, %88, %cst_60 {dimension_numbers = #tpu.dot_dimension_numbers<[1], [0], [0], [1], [0, 0, 1, 1], [], []>} : vector<64x8xf32>, vector<8x64xf32>, vector<64x64xf32> -> vector<64x64xf32>
    %cst_61 = arith.constant 0.353553385 : f32
    %165 = vector.broadcast %cst_61 : f32 to vector<64x64xf32>
    %166 = arith.mulf %164, %165 : vector<64x64xf32>
    %167 = arith.addf %166, %3 : vector<64x64xf32>
    %cst_62 = arith.constant dense<0xFF800000> : vector<64xf32>
    %168 = vector.multi_reduction <maximumf>, %167, %cst_62 [1] : vector<64x64xf32> to vector<64xf32>
    %169 = vector.shape_cast %168 : vector<64xf32> to vector<64x1xf32>
    %170 = vector.broadcast %169 : vector<64x1xf32> to vector<64x64xf32>
    %171 = arith.subf %167, %170 : vector<64x64xf32>
    %172 = math.exp %171 : vector<64x64xf32>
    %cst_63 = arith.constant dense<0.000000e+00> : vector<64xf32>
    %173 = vector.multi_reduction <add>, %172, %cst_63 [1] : vector<64x64xf32> to vector<64xf32>
    %174 = vector.shape_cast %173 : vector<64xf32> to vector<64x1xf32>
    %175 = tpu.reciprocal %174 {approx = true} : vector<64x1xf32> -> vector<64x1xf32>
    %176 = vector.broadcast %175 : vector<64x1xf32> to vector<64x64xf32>
    %177 = arith.mulf %172, %176 : vector<64x64xf32>
    %cst_64 = arith.constant dense<0.000000e+00> : vector<64x8xf32>
    %178 = tpu.matmul %177, %94, %cst_64 {dimension_numbers = #tpu.dot_dimension_numbers<[1], [0], [0], [1], [0, 0, 1, 1], [], []>} : vector<64x64xf32>, vector<64x8xf32>, vector<64x8xf32> -> vector<64x8xf32>
    %179 = vector.extract_strided_slice %178 {offsets = [0, 0], sizes = [16, 8], strides = [1, 1]} : vector<64x8xf32> to vector<16x8xf32>
    %180 = vector.extract_strided_slice %178 {offsets = [16, 0], sizes = [16, 8], strides = [1, 1]} : vector<64x8xf32> to vector<16x8xf32>
    %181 = vector.extract_strided_slice %178 {offsets = [32, 0], sizes = [16, 8], strides = [1, 1]} : vector<64x8xf32> to vector<16x8xf32>
    %182 = vector.extract_strided_slice %178 {offsets = [48, 0], sizes = [16, 8], strides = [1, 1]} : vector<64x8xf32> to vector<16x8xf32>
    %183 = tpu.concatenate %179, %180, %181, %182 in 1 : vector<16x8xf32>, vector<16x8xf32>, vector<16x8xf32>, vector<16x8xf32> -> vector<16x32xf32>
    %c0_65 = arith.constant 0 : index
    %c0_66 = arith.constant 0 : index
    %184 = vector.load %arg18[%c0_65, %c0_66] : memref<32x32xf32, #tpu.memory_space<vmem>>, vector<32x32xf32>
    %cst_67 = arith.constant dense<0.000000e+00> : vector<16x32xf32>
    %185 = tpu.matmul %183, %184, %cst_67 {dimension_numbers = #tpu.dot_dimension_numbers<[1], [0], [0], [1], [0, 0, 1, 1], [], []>} : vector<16x32xf32>, vector<32x32xf32>, vector<16x32xf32> -> vector<16x32xf32>
    %c0_68 = arith.constant 0 : index
    %c0_69 = arith.constant 0 : index
    %186 = vector.load %arg19[%c0_68, %c0_69] : memref<1x32xf32, #tpu.memory_space<vmem>>, vector<1x32xf32>
    %187 = vector.broadcast %186 : vector<1x32xf32> to vector<16x32xf32>
    %188 = arith.addf %185, %187 : vector<16x32xf32>
    %189 = arith.addf %76, %188 : vector<16x32xf32>
    %c0_70 = arith.constant 0 : index
    %c0_71 = arith.constant 0 : index
    %190 = vector.load %arg8[%c0_70, %c0_71] : memref<1x32xf32, #tpu.memory_space<vmem>>, vector<1x32xf32>
    %c0_72 = arith.constant 0 : index
    %c0_73 = arith.constant 0 : index
    %191 = vector.load %arg9[%c0_72, %c0_73] : memref<1x32xf32, #tpu.memory_space<vmem>>, vector<1x32xf32>
    %cst_74 = arith.constant dense<0.000000e+00> : vector<16xf32>
    %192 = vector.multi_reduction <add>, %189, %cst_74 [1] : vector<16x32xf32> to vector<16xf32>
    %193 = vector.shape_cast %192 : vector<16xf32> to vector<16x1xf32>
    %cst_75 = arith.constant 3.200000e+01 : f32
    %194 = vector.broadcast %cst_75 : f32 to vector<16x1xf32>
    %195 = arith.divf %193, %194 : vector<16x1xf32>
    %196 = vector.broadcast %195 : vector<16x1xf32> to vector<16x32xf32>
    %197 = arith.subf %189, %196 : vector<16x32xf32>
    %198 = arith.mulf %197, %197 : vector<16x32xf32>
    %cst_76 = arith.constant dense<0.000000e+00> : vector<16xf32>
    %199 = vector.multi_reduction <add>, %198, %cst_76 [1] : vector<16x32xf32> to vector<16xf32>
    %200 = vector.shape_cast %199 : vector<16xf32> to vector<16x1xf32>
    %cst_77 = arith.constant 0.0322580636 : f32
    %201 = vector.broadcast %cst_77 : f32 to vector<16x1xf32>
    %202 = arith.mulf %200, %201 : vector<16x1xf32>
    %203 = math.sqrt %202 : vector<16x1xf32>
    %cst_78 = arith.constant 9.99999997E-7 : f32
    %204 = vector.broadcast %cst_78 : f32 to vector<16x1xf32>
    %205 = arith.addf %203, %204 : vector<16x1xf32>
    %206 = tpu.reciprocal %205 {approx = true} : vector<16x1xf32> -> vector<16x1xf32>
    %207 = vector.broadcast %190 : vector<1x32xf32> to vector<16x32xf32>
    %208 = arith.mulf %207, %197 : vector<16x32xf32>
    %209 = vector.broadcast %206 : vector<16x1xf32> to vector<16x32xf32>
    %210 = arith.mulf %208, %209 : vector<16x32xf32>
    %211 = vector.broadcast %191 : vector<1x32xf32> to vector<16x32xf32>
    %212 = arith.addf %210, %211 : vector<16x32xf32>
    %c0_79 = arith.constant 0 : index
    %c0_80 = arith.constant 0 : index
    %213 = vector.load %arg20[%c0_79, %c0_80] : memref<32x64xf32, #tpu.memory_space<vmem>>, vector<32x64xf32>
    %cst_81 = arith.constant dense<0.000000e+00> : vector<16x64xf32>
    %214 = tpu.matmul %212, %213, %cst_81 {dimension_numbers = #tpu.dot_dimension_numbers<[1], [0], [0], [1], [0, 0, 1, 1], [], []>} : vector<16x32xf32>, vector<32x64xf32>, vector<16x64xf32> -> vector<16x64xf32>
    %c0_82 = arith.constant 0 : index
    %c0_83 = arith.constant 0 : index
    %215 = vector.load %arg21[%c0_82, %c0_83] : memref<1x64xf32, #tpu.memory_space<vmem>>, vector<1x64xf32>
    %216 = vector.broadcast %215 : vector<1x64xf32> to vector<16x64xf32>
    %217 = arith.addf %214, %216 : vector<16x64xf32>
    %cst_84 = arith.constant 0.000000e+00 : f32
    %218 = vector.broadcast %cst_84 : f32 to vector<16x64xf32>
    %219 = arith.maximumf %217, %218 : vector<16x64xf32>
    %c0_85 = arith.constant 0 : index
    %c0_86 = arith.constant 0 : index
    %220 = vector.load %arg22[%c0_85, %c0_86] : memref<64x32xf32, #tpu.memory_space<vmem>>, vector<64x32xf32>
    %cst_87 = arith.constant dense<0.000000e+00> : vector<16x32xf32>
    %221 = tpu.matmul %219, %220, %cst_87 {dimension_numbers = #tpu.dot_dimension_numbers<[1], [0], [0], [1], [0, 0, 1, 1], [], []>} : vector<16x64xf32>, vector<64x32xf32>, vector<16x32xf32> -> vector<16x32xf32>
    %c0_88 = arith.constant 0 : index
    %c0_89 = arith.constant 0 : index
    %222 = vector.load %arg23[%c0_88, %c0_89] : memref<1x32xf32, #tpu.memory_space<vmem>>, vector<1x32xf32>
    %223 = vector.broadcast %222 : vector<1x32xf32> to vector<16x32xf32>
    %224 = arith.addf %221, %223 : vector<16x32xf32>
    %225 = arith.addf %189, %224 : vector<16x32xf32>
    %c0_90 = arith.constant 0 : index
    %c0_91 = arith.constant 0 : index
    %226 = vector.load %arg24[%c0_90, %c0_91] : memref<16x32xf32, #tpu.memory_space<vmem>>, vector<16x32xf32>
    tpu.vector_store %arg24[%c0_90, %c0_91], %225 {strides = array<i32>} : memref<16x32xf32, #tpu.memory_space<vmem>>, vector<16x32xf32>,
    return
  }
}

</mosaic_0001>

<llo_original>
// kernel: tpu_custom_call.1
$region0: #{tpu_custom_call.1}
  #allocation0 [shape = 'u32[]', space=smem, size = 0x4, offset = 0x4, fixed_abs, tag = 'smem constant byte address 0x4 - core index']
  #allocation1 [shape = 'u32[144,128]{1,0:T(1,128)}', space=vmem, size = 0x12000, scoped, tag = 'internal scratch']
  %s0 = inlined_call_operand.hbm [shape: f32[16,32], index: 0, kind: input, shape index: {}]
  %s1 = inlined_call_operand.hbm [shape: f32[16,32], index: 1, kind: input, shape index: {}]
  %s2 = inlined_call_operand.vmem [shape: f32[64,64], index: 2, kind: input, shape index: {}]
  %s3 = inlined_call_operand.hbm [shape: f32[64,64], index: 3, kind: input, shape index: {}]
  %s4 = inlined_call_operand.hbm [shape: f32[1,32], index: 4, kind: input, shape index: {}]
  %s5 = inlined_call_operand.hbm [shape: f32[1,32], index: 5, kind: input, shape index: {}]
  %s6 = inlined_call_operand.hbm [shape: f32[1,32], index: 6, kind: input, shape index: {}]
  %s7 = inlined_call_operand.hbm [shape: f32[1,32], index: 7, kind: input, shape index: {}]
  %s8 = inlined_call_operand.hbm [shape: f32[1,32], index: 8, kind: input, shape index: {}]
  %s9 = inlined_call_operand.hbm [shape: f32[1,32], index: 9, kind: input, shape index: {}]
  %s10 = inlined_call_operand.vmem [shape: f32[32,96], index: 10, kind: input, shape index: {}]
  %s11 = inlined_call_operand.hbm [shape: f32[1,96], index: 11, kind: input, shape index: {}]
  %s12 = inlined_call_operand.vmem [shape: f32[32,32], index: 12, kind: input, shape index: {}]
  %s13 = inlined_call_operand.hbm [shape: f32[1,32], index: 13, kind: input, shape index: {}]
  %s14 = inlined_call_operand.hbm [shape: f32[32,32], index: 14, kind: input, shape index: {}]
  %s15 = inlined_call_operand.hbm [shape: f32[1,32], index: 15, kind: input, shape index: {}]
  %s16 = inlined_call_operand.hbm [shape: f32[32,64], index: 16, kind: input, shape index: {}]
  %s17 = inlined_call_operand.hbm [shape: f32[1,64], index: 17, kind: input, shape index: {}]
  %s18 = inlined_call_operand.hbm [shape: f32[32,32], index: 18, kind: input, shape index: {}]
  %s19 = inlined_call_operand.vmem [shape: f32[1,32], index: 19, kind: input, shape index: {}]
  %s20 = inlined_call_operand.hbm [shape: f32[32,64], index: 20, kind: input, shape index: {}]
  %s21 = inlined_call_operand.vmem [shape: f32[1,64], index: 21, kind: input, shape index: {}]
  %s22 = inlined_call_operand.vmem [shape: f32[64,32], index: 22, kind: input, shape index: {}]
  %s23 = inlined_call_operand.vmem [shape: f32[1,32], index: 23, kind: input, shape index: {}]
  %s24 = inlined_call_operand.hbm [shape: f32[16,32], index: 24, kind: output, shape index: {0}]
  %s25 = inlined_call_operand.hbm [shape: f32[16,32], index: 25, kind: output, shape index: {1}]
  %26 = xla_tuple %s24, %s25
  %s27 = sld [smem:[#allocation0]]
  $region182: #{tpu_custom_call.1} parent=0
    _
  %s29 = ssub.s32 1, %s27
  %s30 = scalar_select 0, %s29, %s27
  $region1: #{tpu_custom_call.1} parent=0
    #allocation2 [shape = 'u8[8192]{0}', space=vmem, size = 0x2000, scoped, tag = 'input window, operand 0, single buffered']
    #allocation3 [shape = 's32[1]{0}', space=sflag, size = 0x4, scoped, tag = 'scoped memory for tpu_custom_call.1']
    #allocation4 [shape = 's32[1]{0}', space=sflag, size = 0x4, scoped, tag = 'scoped memory for tpu_custom_call.1']
    #allocation5 [shape = 'u8[8192]{0}', space=vmem, size = 0x2000, scoped, tag = 'input window, operand 1, single buffered']
    #allocation6 [shape = 's32[1]{0}', space=sflag, size = 0x4, scoped, tag = 'scoped memory for tpu_custom_call.1']
    #allocation7 [shape = 'u8[32768]{0}', space=vmem, size = 0x8000, scoped, tag = 'input window, operand 3, single buffered']
    #allocation8 [shape = 'u8[512]{0}', space=vmem, size = 0x400, scoped, tag = 'input window, operand 4, single buffered']
    #allocation9 [shape = 's32[1]{0}', space=sflag, size = 0x4, scoped, tag = 'scoped memory for tpu_custom_call.1']
    #allocation10 [shape = 'u8[512]{0}', space=vmem, size = 0x400, scoped, tag = 'input window, operand 5, single buffered']
    #allocation11 [shape = 'u8[512]{0}', space=vmem, size = 0x400, scoped, tag = 'input window, operand 6, single buffered']
    #allocation12 [shape = 's32[1]{0}', space=sflag, size = 0x4, scoped, tag = 'scoped memory for tpu_custom_call.1']
    #allocation13 [shape = 'u8[512]{0}', space=vmem, size = 0x400, scoped, tag = 'input window, operand 7, single buffered']
    #allocation14 [shape = 'u8[512]{0}', space=vmem, size = 0x400, scoped, tag = 'input window, operand 8, single buffered']
    #allocation15 [shape = 's32[1]{0}', space=sflag, size = 0x4, scoped, tag = 'scoped memory for tpu_custom_call.1']
    #allocation16 [shape = 'u8[512]{0}', space=vmem, size = 0x400, scoped, tag = 'input window, operand 9, single buffered']
    #allocation17 [shape = 'u8[512]{0}', space=vmem, size = 0x400, scoped, tag = 'input window, operand 11, single buffered']
    #allocation18 [shape = 's32[1]{0}', space=sflag, size = 0x4, scoped, tag = 'scoped memory for tpu_custom_call.1']
    #allocation19 [shape = 'u8[512]{0}', space=vmem, size = 0x400, scoped, tag = 'input window, operand 13, single buffered']
    #allocation20 [shape = 'u8[16384]{0}', space=vmem, size = 0x4000, scoped, tag = 'input window, operand 14, single buffered']
    #allocation21 [shape = 's32[1]{0}', space=sflag, size = 0x4, scoped, tag = 'scoped memory for tpu_custom_call.1']
    #allocation22 [shape = 'u8[512]{0}', space=vmem, size = 0x400, scoped, tag = 'input window, operand 15, single buffered']
    #allocation23 [shape = 'u8[16384]{0}', space=vmem, size = 0x4000, scoped, tag = 'input window, operand 16, single buffered']
    #allocation24 [shape = 's32[1]{0}', space=sflag, size = 0x4, scoped, tag = 'scoped memory for tpu_custom_call.1']
    #allocation25 [shape = 'u8[512]{0}', space=vmem, size = 0x400, scoped, tag = 'input window, operand 17, single buffered']
    #allocation26 [shape = 'u8[16384]{0}', space=vmem, size = 0x4000, scoped, tag = 'input window, operand 18, single buffered']
    #allocation27 [shape = 's32[1]{0}', space=sflag, size = 0x4, scoped, tag = 'scoped memory for tpu_custom_call.1']
    #allocation28 [shape = 'u8[16384]{0}', space=vmem, size = 0x4000, scoped, tag = 'input window, operand 20, single buffered']
    #allocation29 [shape = 'u8[8192]{0}', space=vmem, size = 0x2000, scoped, tag = 'output window, operand 0, single buffered']
    #allocation30 [shape = 'u8[8192]{0}', space=vmem, size = 0x2000, scoped, tag = 'output window, operand 1, single buffered']
    #allocation31 [shape = 's32[1]{0}', space=sflag, size = 0x4, scoped, tag = 'scoped memory for tpu_custom_call.1']
    %31 = vsyncpa [#allocation3], 0
    %32 = vsyncpa [#allocation6], 0
    %33 = vsyncpa [#allocation9], 0
    %34 = vsyncpa [#allocation12], 0
    %35 = vsyncpa [#allocation15], 0
    %36 = vsyncpa [#allocation18], 0
    %37 = vsyncpa [#allocation21], 0
    %38 = vsyncpa [#allocation24], 0
    %39 = vsyncpa [#allocation27], 0
    %40 = vsyncpa [#allocation4], 0
    %41 = vsyncpa [#allocation31], 0
    // Predicated region
    $region2: #{tpu_custom_call.1} parent=1 // pred_check
      _
    $region3: #{tpu_custom_call.1} parent=1 // pred_check_branch
      %43 = sbr.rel (0) target = $region5
    $region4: #{tpu_custom_call.1} parent=1 // pred_region
      %s45 = ssub.s32 256, 256
      %46 = vsyncadd [#allocation3], %s45
      %s47 = sshll.u32 [#allocation2], 4
      %s48 = int_to_ptr.vmem [resolvable:$true] %s47
      %53 = dma.hbm_to_vmem [thread:$0]  %s0, 256, %s48, [#allocation3], 128, 128, 8
    $region5: #{tpu_custom_call.1} parent=1 // pred_fallthru
      _
    // Predicated region
    $region6: #{tpu_custom_call.1} parent=1 // pred_check
      _
    $region7: #{tpu_custom_call.1} parent=1 // pred_check_branch
      %55 = sbr.rel (0) target = $region9
    $region8: #{tpu_custom_call.1} parent=1 // pred_region
      %s57 = ssub.s32 256, 256
      %58 = vsyncadd [#allocation6], %s57
      %s59 = sshll.u32 [#allocation5], 4
      %s60 = int_to_ptr.vmem [resolvable:$true] %s59
      %65 = dma.hbm_to_vmem [thread:$0]  %s1, 256, %s60, [#allocation6], 128, 128, 8
    $region9: #{tpu_custom_call.1} parent=1 // pred_fallthru
      _
    // Predicated region
    $region10: #{tpu_custom_call.1} parent=1 // pred_check
      _
    $region11: #{tpu_custom_call.1} parent=1 // pred_check_branch
      %67 = sbr.rel (0) target = $region13
    $region12: #{tpu_custom_call.1} parent=1 // pred_region
      _
    $region13: #{tpu_custom_call.1} parent=1 // pred_fallthru
      _
    // Predicated region
    $region14: #{tpu_custom_call.1} parent=1 // pred_check
      _
    $region15: #{tpu_custom_call.1} parent=1 // pred_check_branch
      %69 = sbr.rel (0) target = $region17
    $region16: #{tpu_custom_call.1} parent=1 // pred_region
      %s71 = ssub.s32 1024, 1024
      %72 = vsyncadd [#allocation6], %s71
      %s73 = sshll.u32 [#allocation7], 4
      %s74 = int_to_ptr.vmem [resolvable:$true] %s73
      %79 = dma.hbm_to_vmem [thread:$0]  %s3, 1024, %s74, [#allocation6], 128, 128, 8
    $region17: #{tpu_custom_call.1} parent=1 // pred_fallthru
      _
    // Predicated region
    $region18: #{tpu_custom_call.1} parent=1 // pred_check
      _
    $region19: #{tpu_custom_call.1} parent=1 // pred_check_branch
      %81 = sbr.rel (0) target = $region21
    $region20: #{tpu_custom_call.1} parent=1 // pred_region
      %s83 = ssub.s32 16, 16
      %84 = vsyncadd [#allocation9], %s83
      %s86 = sshll.u32 [#allocation8], 4
      %s87 = int_to_ptr.vmem [resolvable:$true] %s86
      %89 = dma.hbm_to_vmem [thread:$0]  %s4, 16, %s87, [#allocation9]
    $region21: #{tpu_custom_call.1} parent=1 // pred_fallthru
      _
    // Predicated region
    $region22: #{tpu_custom_call.1} parent=1 // pred_check
      _
    $region23: #{tpu_custom_call.1} parent=1 // pred_check_branch
      %91 = sbr.rel (0) target = $region25
    $region24: #{tpu_custom_call.1} parent=1 // pred_region
      %s93 = ssub.s32 16, 16
      %94 = vsyncadd [#allocation9], %s93
      %s96 = sshll.u32 [#allocation10], 4
      %s97 = int_to_ptr.vmem [resolvable:$true] %s96
      %99 = dma.hbm_to_vmem [thread:$0]  %s5, 16, %s97, [#allocation9]
    $region25: #{tpu_custom_call.1} parent=1 // pred_fallthru
      _
    // Predicated region
    $region26: #{tpu_custom_call.1} parent=1 // pred_check
      _
    $region27: #{tpu_custom_call.1} parent=1 // pred_check_branch
      %101 = sbr.rel (0) target = $region29
    $region28: #{tpu_custom_call.1} parent=1 // pred_region
      %s103 = ssub.s32 16, 16
      %104 = vsyncadd [#allocation12], %s103
      %s106 = sshll.u32 [#allocation11], 4
      %s107 = int_to_ptr.vmem [resolvable:$true] %s106
      %109 = dma.hbm_to_vmem [thread:$0]  %s6, 16, %s107, [#allocation12]
    $region29: #{tpu_custom_call.1} parent=1 // pred_fallthru
      _
    // Predicated region
    $region30: #{tpu_custom_call.1} parent=1 // pred_check
      _
    $region31: #{tpu_custom_call.1} parent=1 // pred_check_branch
      %111 = sbr.rel (0) target = $region33
    $region32: #{tpu_custom_call.1} parent=1 // pred_region
      %s113 = ssub.s32 16, 16
      %114 = vsyncadd [#allocation12], %s113
      %s116 = sshll.u32 [#allocation13], 4
      %s117 = int_to_ptr.vmem [resolvable:$true] %s116
      %119 = dma.hbm_to_vmem [thread:$0]  %s7, 16, %s117, [#allocation12]
    $region33: #{tpu_custom_call.1} parent=1 // pred_fallthru
      _
    // Predicated region
    $region34: #{tpu_custom_call.1} parent=1 // pred_check
      _
    $region35: #{tpu_custom_call.1} parent=1 // pred_check_branch
      %121 = sbr.rel (0) target = $region37
    $region36: #{tpu_custom_call.1} parent=1 // pred_region
      %s123 = ssub.s32 16, 16
      %124 = vsyncadd [#allocation15], %s123
      %s126 = sshll.u32 [#allocation14], 4
      %s127 = int_to_ptr.vmem [resolvable:$true] %s126
      %129 = dma.hbm_to_vmem [thread:$0]  %s8, 16, %s127, [#allocation15]
    $region37: #{tpu_custom_call.1} parent=1 // pred_fallthru
      _
    // Predicated region
    $region38: #{tpu_custom_call.1} parent=1 // pred_check
      _
    $region39: #{tpu_custom_call.1} parent=1 // pred_check_branch
      %131 = sbr.rel (0) target = $region41
    $region40: #{tpu_custom_call.1} parent=1 // pred_region
      %s133 = ssub.s32 16, 16
      %134 = vsyncadd [#allocation15], %s133
      %s136 = sshll.u32 [#allocation16], 4
      %s137 = int_to_ptr.vmem [resolvable:$true] %s136
      %139 = dma.hbm_to_vmem [thread:$0]  %s9, 16, %s137, [#allocation15]
    $region41: #{tpu_custom_call.1} parent=1 // pred_fallthru
      _
    // Predicated region
    $region42: #{tpu_custom_call.1} parent=1 // pred_check
      _
    $region43: #{tpu_custom_call.1} parent=1 // pred_check_branch
      %141 = sbr.rel (0) target = $region45
    $region44: #{tpu_custom_call.1} parent=1 // pred_region
      _
    $region45: #{tpu_custom_call.1} parent=1 // pred_fallthru
      _
    // Predicated region
    $region46: #{tpu_custom_call.1} parent=1 // pred_check
      _
    $region47: #{tpu_custom_call.1} parent=1 // pred_check_branch
      %143 = sbr.rel (0) target = $region49
    $region48: #{tpu_custom_call.1} parent=1 // pred_region
      %s145 = ssub.s32 16, 16
      %146 = vsyncadd [#allocation18], %s145
      %s148 = sshll.u32 [#allocation17], 4
      %s149 = int_to_ptr.vmem [resolvable:$true] %s148
      %151 = dma.hbm_to_vmem [thread:$0]  %s11, 16, %s149, [#allocation18]
    $region49: #{tpu_custom_call.1} parent=1 // pred_fallthru
      _
    // Predicated region
    $region50: #{tpu_custom_call.1} parent=1 // pred_check
      _
    $region51: #{tpu_custom_call.1} parent=1 // pred_check_branch
      %153 = sbr.rel (0) target = $region53
    $region52: #{tpu_custom_call.1} parent=1 // pred_region
      _
    $region53: #{tpu_custom_call.1} parent=1 // pred_fallthru
      _
    // Predicated region
    $region54: #{tpu_custom_call.1} parent=1 // pred_check
      _
    $region55: #{tpu_custom_call.1} parent=1 // pred_check_branch
      %155 = sbr.rel (0) target = $region57
    $region56: #{tpu_custom_call.1} parent=1 // pred_region
      %s157 = ssub.s32 16, 16
      %158 = vsyncadd [#allocation18], %s157
      %s160 = sshll.u32 [#allocation19], 4
      %s161 = int_to_ptr.vmem [resolvable:$true] %s160
      %163 = dma.hbm_to_vmem [thread:$0]  %s13, 16, %s161, [#allocation18]
    $region57: #{tpu_custom_call.1} parent=1 // pred_fallthru
      _
    // Predicated region
    $region58: #{tpu_custom_call.1} parent=1 // pred_check
      _
    $region59: #{tpu_custom_call.1} parent=1 // pred_check_branch
      %165 = sbr.rel (0) target = $region61
    $region60: #{tpu_custom_call.1} parent=1 // pred_region
      %s167 = ssub.s32 512, 512
      %168 = vsyncadd [#allocation21], %s167
      %s169 = sshll.u32 [#allocation20], 4
      %s170 = int_to_ptr.vmem [resolvable:$true] %s169
      %175 = dma.hbm_to_vmem [thread:$0]  %s14, 512, %s170, [#allocation21], 128, 128, 8
    $region61: #{tpu_custom_call.1} parent=1 // pred_fallthru
      _
    // Predicated region
    $region62: #{tpu_custom_call.1} parent=1 // pred_check
      _
    $region63: #{tpu_custom_call.1} parent=1 // pred_check_branch
      %177 = sbr.rel (0) target = $region65
    $region64: #{tpu_custom_call.1} parent=1 // pred_region
      %s179 = ssub.s32 16, 16
      %180 = vsyncadd [#allocation21], %s179
      %s182 = sshll.u32 [#allocation22], 4
      %s183 = int_to_ptr.vmem [resolvable:$true] %s182
      %185 = dma.hbm_to_vmem [thread:$0]  %s15, 16, %s183, [#allocation21]
    $region65: #{tpu_custom_call.1} parent=1 // pred_fallthru
      _
    // Predicated region
    $region66: #{tpu_custom_call.1} parent=1 // pred_check
      _
    $region67: #{tpu_custom_call.1} parent=1 // pred_check_branch
      %187 = sbr.rel (0) target = $region69
    $region68: #{tpu_custom_call.1} parent=1 // pred_region
      %s189 = ssub.s32 512, 512
      %190 = vsyncadd [#allocation24], %s189
      %s191 = sshll.u32 [#allocation23], 4
      %s192 = int_to_ptr.vmem [resolvable:$true] %s191
      %197 = dma.hbm_to_vmem [thread:$0]  %s16, 512, %s192, [#allocation24], 128, 128, 8
    $region69: #{tpu_custom_call.1} parent=1 // pred_fallthru
      _
    // Predicated region
    $region70: #{tpu_custom_call.1} parent=1 // pred_check
      _
    $region71: #{tpu_custom_call.1} parent=1 // pred_check_branch
      %199 = sbr.rel (0) target = $region73
    $region72: #{tpu_custom_call.1} parent=1 // pred_region
      %s201 = ssub.s32 16, 16
      %202 = vsyncadd [#allocation24], %s201
      %s204 = sshll.u32 [#allocation25], 4
      %s205 = int_to_ptr.vmem [resolvable:$true] %s204
      %207 = dma.hbm_to_vmem [thread:$0]  %s17, 16, %s205, [#allocation24]
    $region73: #{tpu_custom_call.1} parent=1 // pred_fallthru
      _
    // Predicated region
    $region74: #{tpu_custom_call.1} parent=1 // pred_check
      _
    $region75: #{tpu_custom_call.1} parent=1 // pred_check_branch
      %209 = sbr.rel (0) target = $region77
    $region76: #{tpu_custom_call.1} parent=1 // pred_region
      %s211 = ssub.s32 512, 512
      %212 = vsyncadd [#allocation27], %s211
      %s213 = sshll.u32 [#allocation26], 4
      %s214 = int_to_ptr.vmem [resolvable:$true] %s213
      %219 = dma.hbm_to_vmem [thread:$0]  %s18, 512, %s214, [#allocation27], 128, 128, 8
    $region77: #{tpu_custom_call.1} parent=1 // pred_fallthru
      _
    // Predicated region
    $region78: #{tpu_custom_call.1} parent=1 // pred_check
      _
    $region79: #{tpu_custom_call.1} parent=1 // pred_check_branch
      %221 = sbr.rel (0) target = $region81
    $region80: #{tpu_custom_call.1} parent=1 // pred_region
      _
    $region81: #{tpu_custom_call.1} parent=1 // pred_fallthru
      _
    // Predicated region
    $region82: #{tpu_custom_call.1} parent=1 // pred_check
      _
    $region83: #{tpu_custom_call.1} parent=1 // pred_check_branch
      %223 = sbr.rel (0) target = $region85
    $region84: #{tpu_custom_call.1} parent=1 // pred_region
      %s225 = ssub.s32 512, 512
      %226 = vsyncadd [#allocation27], %s225
      %s227 = sshll.u32 [#allocation28], 4
      %s228 = int_to_ptr.vmem [resolvable:$true] %s227
      %233 = dma.hbm_to_vmem [thread:$0]  %s20, 512, %s228, [#allocation27], 128, 128, 8
    $region85: #{tpu_custom_call.1} parent=1 // pred_fallthru
      _
    // Predicated region
    $region86: #{tpu_custom_call.1} parent=1 // pred_check
      _
    $region87: #{tpu_custom_call.1} parent=1 // pred_check_branch
      %235 = sbr.rel (0) target = $region89
    $region88: #{tpu_custom_call.1} parent=1 // pred_region
      _
    $region89: #{tpu_custom_call.1} parent=1 // pred_fallthru
      _
    // Predicated region
    $region90: #{tpu_custom_call.1} parent=1 // pred_check
      _
    $region91: #{tpu_custom_call.1} parent=1 // pred_check_branch
      %237 = sbr.rel (0) target = $region93
    $region92: #{tpu_custom_call.1} parent=1 // pred_region
      _
    $region93: #{tpu_custom_call.1} parent=1 // pred_fallthru
      _
    // Predicated region
    $region94: #{tpu_custom_call.1} parent=1 // pred_check
      _
    $region95: #{tpu_custom_call.1} parent=1 // pred_check_branch
      %239 = sbr.rel (0) target = $region97
    $region96: #{tpu_custom_call.1} parent=1 // pred_region
      _
    $region97: #{tpu_custom_call.1} parent=1 // pred_fallthru
      _
    // Predicated region
    $region98: #{tpu_custom_call.1} parent=1 // pred_check
      _
    $region99: #{tpu_custom_call.1} parent=1 // pred_check_branch
      %241 = sbr.rel (0) target = $region101
    $region100: #{tpu_custom_call.1} parent=1 // pred_region
      %242 = dma.done [#allocation3], 256
    $region101: #{tpu_custom_call.1} parent=1 // pred_fallthru
      _
    // Predicated region
    $region102: #{tpu_custom_call.1} parent=1 // pred_check
      _
    $region103: #{tpu_custom_call.1} parent=1 // pred_check_branch
      %244 = sbr.rel (0) target = $region105
    $region104: #{tpu_custom_call.1} parent=1 // pred_region
      %245 = dma.done [#allocation6], 256
    $region105: #{tpu_custom_call.1} parent=1 // pred_fallthru
      _
    // Predicated region
    $region106: #{tpu_custom_call.1} parent=1 // pred_check
      _
    $region107: #{tpu_custom_call.1} parent=1 // pred_check_branch
      %247 = sbr.rel (0) target = $region109
    $region108: #{tpu_custom_call.1} parent=1 // pred_region
      %248 = dma.done [#allocation6], 1024
    $region109: #{tpu_custom_call.1} parent=1 // pred_fallthru
      _
    // Predicated region
    $region110: #{tpu_custom_call.1} parent=1 // pred_check
      _
    $region111: #{tpu_custom_call.1} parent=1 // pred_check_branch
      %250 = sbr.rel (0) target = $region113
    $region112: #{tpu_custom_call.1} parent=1 // pred_region
      %251 = dma.done [#allocation9], 16
    $region113: #{tpu_custom_call.1} parent=1 // pred_fallthru
      _
    // Predicated region
    $region114: #{tpu_custom_call.1} parent=1 // pred_check
      _
    $region115: #{tpu_custom_call.1} parent=1 // pred_check_branch
      %253 = sbr.rel (0) target = $region117
    $region116: #{tpu_custom_call.1} parent=1 // pred_region
      %254 = dma.done [#allocation9], 16
    $region117: #{tpu_custom_call.1} parent=1 // pred_fallthru
      _
    // Predicated region
    $region118: #{tpu_custom_call.1} parent=1 // pred_check
      _
    $region119: #{tpu_custom_call.1} parent=1 // pred_check_branch
      %256 = sbr.rel (0) target = $region121
    $region120: #{tpu_custom_call.1} parent=1 // pred_region
      %257 = dma.done [#allocation12], 16
    $region121: #{tpu_custom_call.1} parent=1 // pred_fallthru
      _
    // Predicated region
    $region122: #{tpu_custom_call.1} parent=1 // pred_check
      _
    $region123: #{tpu_custom_call.1} parent=1 // pred_check_branch
      %259 = sbr.rel (0) target = $region125
    $region124: #{tpu_custom_call.1} parent=1 // pred_region
      %260 = dma.done [#allocation12], 16
    $region125: #{tpu_custom_call.1} parent=1 // pred_fallthru
      _
    // Predicated region
    $region126: #{tpu_custom_call.1} parent=1 // pred_check
      _
    $region127: #{tpu_custom_call.1} parent=1 // pred_check_branch
      %262 = sbr.rel (0) target = $region129
    $region128: #{tpu_custom_call.1} parent=1 // pred_region
      %263 = dma.done [#allocation15], 16
    $region129: #{tpu_custom_call.1} parent=1 // pred_fallthru
      _
    // Predicated region
    $region130: #{tpu_custom_call.1} parent=1 // pred_check
      _
    $region131: #{tpu_custom_call.1} parent=1 // pred_check_branch
      %265 = sbr.rel (0) target = $region133
    $region132: #{tpu_custom_call.1} parent=1 // pred_region
      %266 = dma.done [#allocation15], 16
    $region133: #{tpu_custom_call.1} parent=1 // pred_fallthru
      _
    // Predicated region
    $region134: #{tpu_custom_call.1} parent=1 // pred_check
      _
    $region135: #{tpu_custom_call.1} parent=1 // pred_check_branch
      %268 = sbr.rel (0) target = $region137
    $region136: #{tpu_custom_call.1} parent=1 // pred_region
      %269 = dma.done [#allocation18], 16
    $region137: #{tpu_custom_call.1} parent=1 // pred_fallthru
      _
    // Predicated region
    $region138: #{tpu_custom_call.1} parent=1 // pred_check
      _
    $region139: #{tpu_custom_call.1} parent=1 // pred_check_branch
      %271 = sbr.rel (0) target = $region141
    $region140: #{tpu_custom_call.1} parent=1 // pred_region
      %272 = dma.done [#allocation18], 16
    $region141: #{tpu_custom_call.1} parent=1 // pred_fallthru
      _
    // Predicated region
    $region142: #{tpu_custom_call.1} parent=1 // pred_check
      _
    $region143: #{tpu_custom_call.1} parent=1 // pred_check_branch
      %274 = sbr.rel (0) target = $region145
    $region144: #{tpu_custom_call.1} parent=1 // pred_region
      %275 = dma.done [#allocation21], 512
    $region145: #{tpu_custom_call.1} parent=1 // pred_fallthru
      _
    // Predicated region
    $region146: #{tpu_custom_call.1} parent=1 // pred_check
      _
    $region147: #{tpu_custom_call.1} parent=1 // pred_check_branch
      %277 = sbr.rel (0) target = $region149
    $region148: #{tpu_custom_call.1} parent=1 // pred_region
      %278 = dma.done [#allocation21], 16
    $region149: #{tpu_custom_call.1} parent=1 // pred_fallthru
      _
    // Predicated region
    $region150: #{tpu_custom_call.1} parent=1 // pred_check
      _
    $region151: #{tpu_custom_call.1} parent=1 // pred_check_branch
      %280 = sbr.rel (0) target = $region153
    $region152: #{tpu_custom_call.1} parent=1 // pred_region
      %281 = dma.done [#allocation24], 512
    $region153: #{tpu_custom_call.1} parent=1 // pred_fallthru
      _
    // Predicated region
    $region154: #{tpu_custom_call.1} parent=1 // pred_check
      _
    $region155: #{tpu_custom_call.1} parent=1 // pred_check_branch
      %283 = sbr.rel (0) target = $region157
    $region156: #{tpu_custom_call.1} parent=1 // pred_region
      %284 = dma.done [#allocation24], 16
    $region157: #{tpu_custom_call.1} parent=1 // pred_fallthru
      _
    // Predicated region
    $region158: #{tpu_custom_call.1} parent=1 // pred_check
      _
    $region159: #{tpu_custom_call.1} parent=1 // pred_check_branch
      %286 = sbr.rel (0) target = $region161
    $region160: #{tpu_custom_call.1} parent=1 // pred_region
      %287 = dma.done [#allocation27], 512
    $region161: #{tpu_custom_call.1} parent=1 // pred_fallthru
      _
    // Predicated region
    $region162: #{tpu_custom_call.1} parent=1 // pred_check
      _
    $region163: #{tpu_custom_call.1} parent=1 // pred_check_branch
      %289 = sbr.rel (0) target = $region165
    $region164: #{tpu_custom_call.1} parent=1 // pred_region
      %290 = dma.done [#allocation27], 512
    $region165: #{tpu_custom_call.1} parent=1 // pred_fallthru
      _
    %v291 = vld [vmem:[#allocation2] sm:$0xff]
    %v292 = vld [vmem:[#allocation2 + $0x8] sm:$0xff]
    %v293 = vld [vmem:[#allocation5] sm:$0xff]
    %v294 = vld [vmem:[#allocation5 + $0x8] sm:$0xff]
    %v295 = vld [vmem:[%s2] sm:$0xff]
    %v296 = vld [vmem:[%s2 + $0x8] sm:$0xff]
    %v297 = vld [vmem:[%s2 + $0x10] sm:$0xff]
    %v298 = vld [vmem:[%s2 + $0x18] sm:$0xff]
    %v299 = vld [vmem:[%s2 + $0x20] sm:$0xff]
    %v300 = vld [vmem:[%s2 + $0x28] sm:$0xff]
    %v301 = vld [vmem:[%s2 + $0x30] sm:$0xff]
    %v302 = vld [vmem:[%s2 + $0x38] sm:$0xff]
    %v303 = vld [vmem:[#allocation7] sm:$0xff]
    %v304 = vld [vmem:[#allocation7 + $0x8] sm:$0xff]
    %v305 = vld [vmem:[#allocation7 + $0x10] sm:$0xff]
    %v306 = vld [vmem:[#allocation7 + $0x18] sm:$0xff]
    %v307 = vld [vmem:[#allocation7 + $0x20] sm:$0xff]
    %v308 = vld [vmem:[#allocation7 + $0x28] sm:$0xff]
    %v309 = vld [vmem:[#allocation7 + $0x30] sm:$0xff]
    %v310 = vld [vmem:[#allocation7 + $0x38] sm:$0xff]
    %v311 = vld [vmem:[#allocation8] sm:$0x1]
    %v312 = vld [vmem:[#allocation10] sm:$0x1]
    %vm313 = vcmask 261120
    %v314 = vsel %vm313, %v291, 0.0
    %315 = vadd.xlane.f32.xlu0 %v314
    %v316 = vpop.xlane.xlu0 %315
    %v317 = vsel %vm313, %v292, 0.0
    %318 = vadd.xlane.f32.xlu0 %v317
    %v319 = vpop.xlane.xlu0 %318
    %v320 = vrcp.pop 32.0
    %v321 = vmul.f32 %v316, %v320
    %v322 = vmul.f32 %v319, %v320
    %v323 = vsub.f32 %v291, %v321
    %v324 = vsub.f32 %v292, %v322
    %v325 = vmul.f32 %v323, %v323
    %v326 = vmul.f32 %v324, %v324
    %v327 = vsel %vm313, %v325, 0.0
    %328 = vadd.xlane.f32.xlu0 %v327
    %v329 = vpop.xlane.xlu0 %328
    %v330 = vsel %vm313, %v326, 0.0
    %331 = vadd.xlane.f32.xlu0 %v330
    %v332 = vpop.xlane.xlu0 %331
    %v333 = vmul.f32 %v329, 0.032258064
    %v334 = vmul.f32 %v332, 0.032258064
    %v335 = vrsqrt.pop %v333
    %v336 = vmul.f32 %v333, %v335
    %vm337 = vcmp.eq.f32.partialorder %v333, inf
    %v338 = vsel %vm337, %v333, %v336
    %vm339 = vcmp.eq.f32.partialorder %v333, 0.0
    %v340 = vand.u32 %v333, 2147483648
    %v341 = vsel %vm339, %v340, %v338
    %v342 = vrsqrt.pop %v334
    %v343 = vmul.f32 %v334, %v342
    %vm344 = vcmp.eq.f32.partialorder %v334, inf
    %v345 = vsel %vm344, %v334, %v343
    %vm346 = vcmp.eq.f32.partialorder %v334, 0.0
    %v347 = vand.u32 %v334, 2147483648
    %v348 = vsel %vm346, %v347, %v345
    %v349 = vadd.f32 %v341, 1e-06
    %v350 = vadd.f32 %v348, 1e-06
    %v351 = vrcp.pop %v349
    %v352 = vrcp.pop %v350
    %v354 = vlaneseq
    %v355 = vshrl.u32 %v354, 7
    %v356 = vsub.s32 0, %v355
    %v357 = vrot.slane %v311, %v356
    %v359 = vmul.f32 %v357, %v323
    %v360 = vmul.f32 %v357, %v324
    %v361 = vmul.f32 %v359, %v351
    %v362 = vmul.f32 %v360, %v352
    %v364 = vlaneseq
    %v365 = vshrl.u32 %v364, 7
    %v366 = vsub.s32 0, %v365
    %v367 = vrot.slane %v312, %v366
    %v369 = vadd.f32 %v361, %v367
    %v370 = vadd.f32 %v362, %v367
    %v371 = vld [vmem:[%s10] sm:$0xff]
    %v372 = vld [vmem:[%s10 + $0x8] sm:$0xff]
    %v373 = vld [vmem:[%s10 + $0x10] sm:$0xff]
    %v374 = vld [vmem:[%s10 + $0x18] sm:$0xff]
    %v375 = vld [vmem:[#allocation17] sm:$0x1]
    %v377 = vlaneseq
    %v378 = vshrl.u32 %v377, 7
    %v379 = vsub.s32 0, %v378
    %v380 = vrot.slane %v375, %v379
    %v383 = vsel %vm313, %v369, 0
    %v386 = vsel %vm313, %v370, 0
    %388 = vmatprep.subr.mxu0 0.0
    %389 = vmatpush1.msra.mxu0 %v371
    %390 = vmatprep.subr.mxu0 0.0
    %391 = vmatpush1.msra.mxu0 %v372
    %392 = vmatprep.subr.mxu0 0.0
    %393 = vmatpush1.msra.mxu0 %v373
    %394 = vmatprep.subr.mxu0 0.0
    %395 = vmatpush1.msra.mxu0 %v374
    %396 = vmatprep.subr.mxu0 0.0
    %397 = vmatpush1.msra.mxu0 0.0
    %398 = vmatprep.subr.mxu0 0.0
    %399 = vmatpush1.msra.mxu0 0.0
    %400 = vmatprep.subr.mxu0 0.0
    %401 = vmatpush1.msra.mxu0 0.0
    %402 = vmatprep.subr.mxu0 0.0
    %403 = vmatpush1.msra.mxu0 0.0
    %404 = vmatprep.subr.mxu0 0.0
    %405 = vmatpush1.msra.mxu0 0.0
    %406 = vmatprep.subr.mxu0 0.0
    %407 = vmatpush1.msra.mxu0 0.0
    %408 = vmatprep.subr.mxu0 0.0
    %409 = vmatpush1.msra.mxu0 0.0
    %410 = vmatprep.subr.mxu0 0.0
    %411 = vmatpush1.msra.mxu0 0.0
    %412 = vmatprep.subr.mxu0 0.0
    %413 = vmatpush1.msra.mxu0 0.0
    %414 = vmatprep.subr.mxu0 0.0
    %415 = vmatpush1.msra.mxu0 0.0
    %416 = vmatprep.subr.mxu0 0.0
    %417 = vmatpush1.msra.mxu0 0.0
    %418 = vmatprep.subr.mxu0 0.0
    %419 = vmatpush1.msra.mxu0 0.0
    %420 = vmatprep.subr.mxu0 0.0
    %421 = vmatpush1.msra.mxu0 0.0
    %422 = vmatprep.subr.mxu0 0.0
    %423 = vmatpush1.msra.mxu0 0.0
    %424 = vmatprep.subr.mxu0 0.0
    %425 = vmatpush1.msra.mxu0 0.0
    %426 = vmatprep.subr.mxu0 0.0
    %427 = vmatpush1.msra.mxu0 0.0
    %428 = vmatprep.subr.mxu0 0.0
    %429 = vmatpush1.msra.mxu0 0.0
    %430 = vmatprep.subr.mxu0 0.0
    %431 = vmatpush1.msra.mxu0 0.0
    %432 = vmatprep.subr.mxu0 0.0
    %433 = vmatpush1.msra.mxu0 0.0
    %434 = vmatprep.subr.mxu0 0.0
    %435 = vmatpush1.msra.mxu0 0.0
    %436 = vmatprep.subr.mxu0 0.0
    %437 = vmatpush1.msra.mxu0 0.0
    %438 = vmatprep.subr.mxu0 0.0
    %439 = vmatpush1.msra.mxu0 0.0
    %440 = vmatprep.subr.mxu0 0.0
    %441 = vmatpush1.msra.mxu0 0.0
    %442 = vmatprep.subr.mxu0 0.0
    %443 = vmatpush1.msra.mxu0 0.0
    %444 = vmatprep.subr.mxu0 0.0
    %445 = vmatpush1.msra.mxu0 0.0
    %446 = vmatprep.subr.mxu0 0.0
    %447 = vmatpush1.msra.mxu0 0.0
    %448 = vmatprep.subr.mxu0 0.0
    %449 = vmatpush1.msra.mxu0 0.0
    %450 = vmatprep.subr.mxu0 0.0
    %451 = vmatpush1.msra.mxu0 0.0
    %452 = vmatprep.mubr.f32.mxu0 0.0
    %453 = vmatmul.mubr.f32.gmra.mrb[0].mxu0 %v383
    %v454 = vpop.f32.mrb[0].mxu0
    %v455 = vadd.f32 %v380, %v454
    %v456 = vpop.f32.mrb[0].mxu0
    %457 = vmatprep.mubr.f32.mxu0 0.0
    %458 = vmatmul.mubr.f32.gmra.mrb[0].mxu0 %v386
    %v459 = vpop.f32.mrb[0].mxu0
    %v460 = vadd.f32 %v380, %v459
    %v461 = vpop.f32.mrb[0].mxu0
    %462 = vdwg.mxu0
    %465 = vrot.lane.b32.xlu0 %v455, 120
    %v466 = vpop.permute.xlu0 %465
    %467 = vrot.lane.b32.xlu0 %v460, 120
    %v468 = vpop.permute.xlu0 %467
    %469 = vrot.lane.b32.xlu0 %v455, 112
    %v470 = vpop.permute.xlu0 %469
    %471 = vrot.lane.b32.xlu0 %v460, 112
    %v472 = vpop.permute.xlu0 %471
    %473 = vrot.lane.b32.xlu0 %v455, 104
    %v474 = vpop.permute.xlu0 %473
    %475 = vrot.lane.b32.xlu0 %v460, 104
    %v476 = vpop.permute.xlu0 %475
    %477 = vrot.lane.b32.xlu0 %v455, 96
    %v478 = vpop.permute.xlu0 %477
    %479 = vrot.lane.b32.xlu0 %v460, 96
    %v480 = vpop.permute.xlu0 %479
    %481 = vrot.lane.b32.xlu0 %v466, 96
    %v482 = vpop.permute.xlu0 %481
    %483 = vrot.lane.b32.xlu0 %v468, 96
    %v484 = vpop.permute.xlu0 %483
    %485 = vrot.lane.b32.xlu0 %v470, 96
    %v486 = vpop.permute.xlu0 %485
    %487 = vrot.lane.b32.xlu0 %v472, 96
    %v488 = vpop.permute.xlu0 %487
    %489 = vrot.lane.b32.xlu0 %v474, 96
    %v490 = vpop.permute.xlu0 %489
    %491 = vrot.lane.b32.xlu0 %v476, 96
    %v492 = vpop.permute.xlu0 %491
    %vm493 = vcmask 64512
    %v494 = vsel %vm493, %v455, 0
    %v496 = vsel %vm493, %v460, 0
    %v498 = vsel %vm493, %v466, 0
    %v500 = vsel %vm493, %v468, 0
    %v502 = vsel %vm493, %v470, 0
    %v504 = vsel %vm493, %v472, 0
    %v506 = vsel %vm493, %v474, 0
    %v508 = vsel %vm493, %v476, 0
    %v510 = vsel %vm493, %v478, 0
    %v512 = vsel %vm493, %v480, 0
    %v514 = vsel %vm493, %v482, 0
    %v516 = vsel %vm493, %v484, 0
    %v518 = vsel %vm493, %v486, 0
    %v520 = vsel %vm493, %v488, 0
    %v522 = vsel %vm493, %v490, 0
    %v524 = vsel %vm493, %v492, 0
    %526 = vmatprep.subr.mxu0 0.0
    %527 = vmatpush1.xpose.msra.mxu0 %v510
    %528 = vmatprep.subr.mxu0 0.0
    %529 = vmatpush1.xpose.msra.mxu0 %v512
    %530 = vmatprep.subr.mxu0 0.0
    %531 = vmatpush1.xpose.msra.mxu0 %v514
    %532 = vmatprep.subr.mxu0 0.0
    %533 = vmatpush1.xpose.msra.mxu0 %v516
    %534 = vmatprep.subr.mxu0 0.0
    %535 = vmatpush1.xpose.msra.mxu0 %v518
    %536 = vmatprep.subr.mxu0 0.0
    %537 = vmatpush1.xpose.msra.mxu0 %v520
    %538 = vmatprep.subr.mxu0 0.0
    %539 = vmatpush1.xpose.msra.mxu0 %v522
    %540 = vmatprep.subr.mxu0 0.0
    %541 = vmatpush1.xpose.msra.mxu0 %v524
    %542 = vmatprep.subr.mxu0 0.0
    %543 = vmatpush1.xpose.msra.mxu0 0.0
    %544 = vmatprep.subr.mxu0 0.0
    %545 = vmatpush1.xpose.msra.mxu0 0.0
    %546 = vmatprep.subr.mxu0 0.0
    %547 = vmatpush1.xpose.msra.mxu0 0.0
    %548 = vmatprep.subr.mxu0 0.0
    %549 = vmatpush1.xpose.msra.mxu0 0.0
    %550 = vmatprep.subr.mxu0 0.0
    %551 = vmatpush1.xpose.msra.mxu0 0.0
    %552 = vmatprep.subr.mxu0 0.0
    %553 = vmatpush1.xpose.msra.mxu0 0.0
    %554 = vmatprep.subr.mxu0 0.0
    %555 = vmatpush1.xpose.msra.mxu0 0.0
    %556 = vmatprep.subr.mxu0 0.0
    %557 = vmatpush1.xpose.msra.mxu0 0.0
    %558 = vmatprep.subr.mxu0 0.0
    %559 = vmatpush1.xpose.msra.mxu0 0.0
    %560 = vmatprep.subr.mxu0 0.0
    %561 = vmatpush1.xpose.msra.mxu0 0.0
    %562 = vmatprep.subr.mxu0 0.0
    %563 = vmatpush1.xpose.msra.mxu0 0.0
    %564 = vmatprep.subr.mxu0 0.0
    %565 = vmatpush1.xpose.msra.mxu0 0.0
    %566 = vmatprep.subr.mxu0 0.0
    %567 = vmatpush1.xpose.msra.mxu0 0.0
    %568 = vmatprep.subr.mxu0 0.0
    %569 = vmatpush1.xpose.msra.mxu0 0.0
    %570 = vmatprep.subr.mxu0 0.0
    %571 = vmatpush1.xpose.msra.mxu0 0.0
    %572 = vmatprep.subr.mxu0 0.0
    %573 = vmatpush1.xpose.msra.mxu0 0.0
    %574 = vmatprep.subr.mxu0 0.0
    %575 = vmatpush1.xpose.msra.mxu0 0.0
    %576 = vmatprep.subr.mxu0 0.0
    %577 = vmatpush1.xpose.msra.mxu0 0.0
    %578 = vmatprep.subr.mxu0 0.0
    %579 = vmatpush1.xpose.msra.mxu0 0.0
    %580 = vmatprep.subr.mxu0 0.0
    %581 = vmatpush1.xpose.msra.mxu0 0.0
    %582 = vmatprep.subr.mxu0 0.0
    %583 = vmatpush1.xpose.msra.mxu0 0.0
    %584 = vmatprep.subr.mxu0 0.0
    %585 = vmatpush1.xpose.msra.mxu0 0.0
    %586 = vmatprep.subr.mxu0 0.0
    %587 = vmatpush1.xpose.msra.mxu0 0.0
    %588 = vmatprep.subr.mxu0 0.0
    %589 = vmatpush1.xpose.msra.mxu0 0.0
    %590 = vmatprep.mubr.f32.mxu0 0.0
    %591 = vmatmul.mubr.f32.gmra.mrb[0].mxu0 %v494
    %v592 = vpop.f32.mrb[0].mxu0
    %v593 = vadd.f32 0.0, %v592
    %v594 = vpop.f32.mrb[0].mxu0
    %595 = vmatprep.mubr.f32.mxu0 0.0
    %596 = vmatmul.mubr.f32.gmra.mrb[0].mxu0 %v496
    %v597 = vpop.f32.mrb[0].mxu0
    %v598 = vadd.f32 0.0, %v597
    %v599 = vpop.f32.mrb[0].mxu0
    %600 = vmatprep.mubr.f32.mxu0 0.0
    %601 = vmatmul.mubr.f32.gmra.mrb[0].mxu0 %v498
    %v602 = vpop.f32.mrb[0].mxu0
    %v603 = vadd.f32 0.0, %v602
    %v604 = vpop.f32.mrb[0].mxu0
    %605 = vmatprep.mubr.f32.mxu0 0.0
    %606 = vmatmul.mubr.f32.gmra.mrb[0].mxu0 %v500
    %v607 = vpop.f32.mrb[0].mxu0
    %v608 = vadd.f32 0.0, %v607
    %v609 = vpop.f32.mrb[0].mxu0
    %610 = vmatprep.mubr.f32.mxu0 0.0
    %611 = vmatmul.mubr.f32.gmra.mrb[0].mxu0 %v502
    %v612 = vpop.f32.mrb[0].mxu0
    %v613 = vadd.f32 0.0, %v612
    %v614 = vpop.f32.mrb[0].mxu0
    %615 = vmatprep.mubr.f32.mxu0 0.0
    %616 = vmatmul.mubr.f32.gmra.mrb[0].mxu0 %v504
    %v617 = vpop.f32.mrb[0].mxu0
    %v618 = vadd.f32 0.0, %v617
    %v619 = vpop.f32.mrb[0].mxu0
    %620 = vmatprep.mubr.f32.mxu0 0.0
    %621 = vmatmul.mubr.f32.gmra.mrb[0].mxu0 %v506
    %v622 = vpop.f32.mrb[0].mxu0
    %v623 = vadd.f32 0.0, %v622
    %v624 = vpop.f32.mrb[0].mxu0
    %625 = vmatprep.mubr.f32.mxu0 0.0
    %626 = vmatmul.mubr.f32.gmra.mrb[0].mxu0 %v508
    %v627 = vpop.f32.mrb[0].mxu0
    %v628 = vadd.f32 0.0, %v627
    %v629 = vpop.f32.mrb[0].mxu0
    %630 = vdwg.mxu0
    %v631 = vmul.f32 %v593, 0.35355338
    %v632 = vmul.f32 %v598, 0.35355338
    %v633 = vmul.f32 %v603, 0.35355338
    %v634 = vmul.f32 %v608, 0.35355338
    %v635 = vmul.f32 %v613, 0.35355338
    %v636 = vmul.f32 %v618, 0.35355338
    %v637 = vmul.f32 %v623, 0.35355338
    %v638 = vmul.f32 %v628, 0.35355338
    %v639 = vadd.f32 %v631, %v295
    %v640 = vadd.f32 %v632, %v296
    %v641 = vadd.f32 %v633, %v297
    %v642 = vadd.f32 %v634, %v298
    %v643 = vadd.f32 %v635, %v299
    %v644 = vadd.f32 %v636, %v300
    %v645 = vadd.f32 %v637, %v301
    %v646 = vadd.f32 %v638, %v302
    %vm647 = vcmask 523264
    %v648 = vsel %vm647, %v639, -inf
    %649 = vmax.xlane.f32.xlu0 %v648
    %v650 = vpop.xlane.xlu0 %649
    %v651 = vsel %vm647, %v640, -inf
    %652 = vmax.xlane.f32.xlu0 %v651
    %v653 = vpop.xlane.xlu0 %652
    %v654 = vsel %vm647, %v641, -inf
    %655 = vmax.xlane.f32.xlu0 %v654
    %v656 = vpop.xlane.xlu0 %655
    %v657 = vsel %vm647, %v642, -inf
    %658 = vmax.xlane.f32.xlu0 %v657
    %v659 = vpop.xlane.xlu0 %658
    %v660 = vsel %vm647, %v643, -inf
    %661 = vmax.xlane.f32.xlu0 %v660
    %v662 = vpop.xlane.xlu0 %661
    %v663 = vsel %vm647, %v644, -inf
    %664 = vmax.xlane.f32.xlu0 %v663
    %v665 = vpop.xlane.xlu0 %664
    %v666 = vsel %vm647, %v645, -inf
    %667 = vmax.xlane.f32.xlu0 %v666
    %v668 = vpop.xlane.xlu0 %667
    %v669 = vsel %vm647, %v646, -inf
    %670 = vmax.xlane.f32.xlu0 %v669
    %v671 = vpop.xlane.xlu0 %670
    %v672 = vsub.f32 %v639, %v650
    %v673 = vsub.f32 %v640, %v653
    %v674 = vsub.f32 %v641, %v656
    %v675 = vsub.f32 %v642, %v659
    %v676 = vsub.f32 %v643, %v662
    %v677 = vsub.f32 %v644, %v665
    %v678 = vsub.f32 %v645, %v668
    %v679 = vsub.f32 %v646, %v671
    %v680 = vmul.f32 %v672, 1.442695
    %v681 = vpow.pop %v680
    %v682 = vmul.f32 %v673, 1.442695
    %v683 = vpow.pop %v682
    %v684 = vmul.f32 %v674, 1.442695
    %v685 = vpow.pop %v684
    %v686 = vmul.f32 %v675, 1.442695
    %v687 = vpow.pop %v686
    %v688 = vmul.f32 %v676, 1.442695
    %v689 = vpow.pop %v688
    %v690 = vmul.f32 %v677, 1.442695
    %v691 = vpow.pop %v690
    %v692 = vmul.f32 %v678, 1.442695
    %v693 = vpow.pop %v692
    %v694 = vmul.f32 %v679, 1.442695
    %v695 = vpow.pop %v694
    %v696 = vsel %vm647, %v681, 0.0
    %697 = vadd.xlane.f32.xlu0 %v696
    %v698 = vpop.xlane.xlu0 %697
    %v699 = vsel %vm647, %v683, 0.0
    %700 = vadd.xlane.f32.xlu0 %v699
    %v701 = vpop.xlane.xlu0 %700
    %v702 = vsel %vm647, %v685, 0.0
    %703 = vadd.xlane.f32.xlu0 %v702
    %v704 = vpop.xlane.xlu0 %703
    %v705 = vsel %vm647, %v687, 0.0
    %706 = vadd.xlane.f32.xlu0 %v705
    %v707 = vpop.xlane.xlu0 %706
    %v708 = vsel %vm647, %v689, 0.0
    %709 = vadd.xlane.f32.xlu0 %v708
    %v710 = vpop.xlane.xlu0 %709
    %v711 = vsel %vm647, %v691, 0.0
    %712 = vadd.xlane.f32.xlu0 %v711
    %v713 = vpop.xlane.xlu0 %712
    %v714 = vsel %vm647, %v693, 0.0
    %715 = vadd.xlane.f32.xlu0 %v714
    %v716 = vpop.xlane.xlu0 %715
    %v717 = vsel %vm647, %v695, 0.0
    %718 = vadd.xlane.f32.xlu0 %v717
    %v719 = vpop.xlane.xlu0 %718
    %v720 = vrcp.pop %v698
    %v721 = vrcp.pop %v701
    %v722 = vrcp.pop %v704
    %v723 = vrcp.pop %v707
    %v724 = vrcp.pop %v710
    %v725 = vrcp.pop %v713
    %v726 = vrcp.pop %v716
    %v727 = vrcp.pop %v719
    %v728 = vmul.f32 %v681, %v720
    %v729 = vmul.f32 %v683, %v721
    %v730 = vmul.f32 %v685, %v722
    %v731 = vmul.f32 %v687, %v723
    %v732 = vmul.f32 %v689, %v724
    %v733 = vmul.f32 %v691, %v725
    %v734 = vmul.f32 %v693, %v726
    %v735 = vmul.f32 %v695, %v727
    %736 = vrot.lane.b32.xlu0 %v455, 64
    %v737 = vpop.permute.xlu0 %736
    %738 = vrot.lane.b32.xlu0 %v460, 64
    %v739 = vpop.permute.xlu0 %738
    %740 = vrot.lane.b32.xlu0 %v466, 64
    %v741 = vpop.permute.xlu0 %740
    %742 = vrot.lane.b32.xlu0 %v468, 64
    %v743 = vpop.permute.xlu0 %742
    %744 = vrot.lane.b32.xlu0 %v470, 64
    %v745 = vpop.permute.xlu0 %744
    %746 = vrot.lane.b32.xlu0 %v472, 64
    %v747 = vpop.permute.xlu0 %746
    %748 = vrot.lane.b32.xlu0 %v474, 64
    %v749 = vpop.permute.xlu0 %748
    %750 = vrot.lane.b32.xlu0 %v476, 64
    %v751 = vpop.permute.xlu0 %750
    %v761 = vsel %vm647, %v728, 0
    %v764 = vsel %vm647, %v729, 0
    %v767 = vsel %vm647, %v730, 0
    %v770 = vsel %vm647, %v731, 0
    %v773 = vsel %vm647, %v732, 0
    %v776 = vsel %vm647, %v733, 0
    %v779 = vsel %vm647, %v734, 0
    %v782 = vsel %vm647, %v735, 0
    %784 = vmatprep.subr.mxu0 0.0
    %785 = vmatpush1.msra.mxu0 %v737
    %786 = vmatprep.subr.mxu0 0.0
    %787 = vmatpush1.msra.mxu0 %v739
    %788 = vmatprep.subr.mxu0 0.0
    %789 = vmatpush1.msra.mxu0 %v741
    %790 = vmatprep.subr.mxu0 0.0
    %791 = vmatpush1.msra.mxu0 %v743
    %792 = vmatprep.subr.mxu0 0.0
    %793 = vmatpush1.msra.mxu0 %v745
    %794 = vmatprep.subr.mxu0 0.0
    %795 = vmatpush1.msra.mxu0 %v747
    %796 = vmatprep.subr.mxu0 0.0
    %797 = vmatpush1.msra.mxu0 %v749
    %798 = vmatprep.subr.mxu0 0.0
    %799 = vmatpush1.msra.mxu0 %v751
    %800 = vmatprep.subr.mxu0 0.0
    %801 = vmatpush1.msra.mxu0 0.0
    %802 = vmatprep.subr.mxu0 0.0
    %803 = vmatpush1.msra.mxu0 0.0
    %804 = vmatprep.subr.mxu0 0.0
    %805 = vmatpush1.msra.mxu0 0.0
    %806 = vmatprep.subr.mxu0 0.0
    %807 = vmatpush1.msra.mxu0 0.0
    %808 = vmatprep.subr.mxu0 0.0
    %809 = vmatpush1.msra.mxu0 0.0
    %810 = vmatprep.subr.mxu0 0.0
    %811 = vmatpush1.msra.mxu0 0.0
    %812 = vmatprep.subr.mxu0 0.0
    %813 = vmatpush1.msra.mxu0 0.0
    %814 = vmatprep.subr.mxu0 0.0
    %815 = vmatpush1.msra.mxu0 0.0
    %816 = vmatprep.subr.mxu0 0.0
    %817 = vmatpush1.msra.mxu0 0.0
    %818 = vmatprep.subr.mxu0 0.0
    %819 = vmatpush1.msra.mxu0 0.0
    %820 = vmatprep.subr.mxu0 0.0
    %821 = vmatpush1.msra.mxu0 0.0
    %822 = vmatprep.subr.mxu0 0.0
    %823 = vmatpush1.msra.mxu0 0.0
    %824 = vmatprep.subr.mxu0 0.0
    %825 = vmatpush1.msra.mxu0 0.0
    %826 = vmatprep.subr.mxu0 0.0
    %827 = vmatpush1.msra.mxu0 0.0
    %828 = vmatprep.subr.mxu0 0.0
    %829 = vmatpush1.msra.mxu0 0.0
    %830 = vmatprep.subr.mxu0 0.0
    %831 = vmatpush1.msra.mxu0 0.0
    %832 = vmatprep.subr.mxu0 0.0
    %833 = vmatpush1.msra.mxu0 0.0
    %834 = vmatprep.subr.mxu0 0.0
    %835 = vmatpush1.msra.mxu0 0.0
    %836 = vmatprep.subr.mxu0 0.0
    %837 = vmatpush1.msra.mxu0 0.0
    %838 = vmatprep.subr.mxu0 0.0
    %839 = vmatpush1.msra.mxu0 0.0
    %840 = vmatprep.subr.mxu0 0.0
    %841 = vmatpush1.msra.mxu0 0.0
    %842 = vmatprep.subr.mxu0 0.0
    %843 = vmatpush1.msra.mxu0 0.0
    %844 = vmatprep.subr.mxu0 0.0
    %845 = vmatpush1.msra.mxu0 0.0
    %846 = vmatprep.subr.mxu0 0.0
    %847 = vmatpush1.msra.mxu0 0.0
    %848 = vmatprep.mubr.f32.mxu0 0.0
    %849 = vmatmul.mubr.f32.gmra.mrb[0].mxu0 %v761
    %v850 = vpop.f32.mrb[0].mxu0
    %v851 = vadd.f32 0.0, %v850
    %v852 = vpop.f32.mrb[0].mxu0
    %853 = vmatprep.mubr.f32.mxu0 0.0
    %854 = vmatmul.mubr.f32.gmra.mrb[0].mxu0 %v764
    %v855 = vpop.f32.mrb[0].mxu0
    %v856 = vadd.f32 0.0, %v855
    %v857 = vpop.f32.mrb[0].mxu0
    %858 = vmatprep.mubr.f32.mxu0 0.0
    %859 = vmatmul.mubr.f32.gmra.mrb[0].mxu0 %v767
    %v860 = vpop.f32.mrb[0].mxu0
    %v861 = vadd.f32 0.0, %v860
    %v862 = vpop.f32.mrb[0].mxu0
    %863 = vmatprep.mubr.f32.mxu0 0.0
    %864 = vmatmul.mubr.f32.gmra.mrb[0].mxu0 %v770
    %v865 = vpop.f32.mrb[0].mxu0
    %v866 = vadd.f32 0.0, %v865
    %v867 = vpop.f32.mrb[0].mxu0
    %868 = vmatprep.mubr.f32.mxu0 0.0
    %869 = vmatmul.mubr.f32.gmra.mrb[0].mxu0 %v773
    %v870 = vpop.f32.mrb[0].mxu0
    %v871 = vadd.f32 0.0, %v870
    %v872 = vpop.f32.mrb[0].mxu0
    %873 = vmatprep.mubr.f32.mxu0 0.0
    %874 = vmatmul.mubr.f32.gmra.mrb[0].mxu0 %v776
    %v875 = vpop.f32.mrb[0].mxu0
    %v876 = vadd.f32 0.0, %v875
    %v877 = vpop.f32.mrb[0].mxu0
    %878 = vmatprep.mubr.f32.mxu0 0.0
    %879 = vmatmul.mubr.f32.gmra.mrb[0].mxu0 %v779
    %v880 = vpop.f32.mrb[0].mxu0
    %v881 = vadd.f32 0.0, %v880
    %v882 = vpop.f32.mrb[0].mxu0
    %883 = vmatprep.mubr.f32.mxu0 0.0
    %884 = vmatmul.mubr.f32.gmra.mrb[0].mxu0 %v782
    %v885 = vpop.f32.mrb[0].mxu0
    %v886 = vadd.f32 0.0, %v885
    %v887 = vpop.f32.mrb[0].mxu0
    %888 = vdwg.mxu0
    %891 = vrot.lane.b32.xlu0 %v861, 8
    %v892 = vpop.permute.xlu0 %891
    %893 = vrot.lane.b32.xlu0 %v866, 8
    %v894 = vpop.permute.xlu0 %893
    %899 = vrot.lane.b32.xlu0 %v871, 16
    %v900 = vpop.permute.xlu0 %899
    %901 = vrot.lane.b32.xlu0 %v876, 16
    %v902 = vpop.permute.xlu0 %901
    %907 = vrot.lane.b32.xlu0 %v881, 24
    %v908 = vpop.permute.xlu0 %907
    %909 = vrot.lane.b32.xlu0 %v886, 24
    %v910 = vpop.permute.xlu0 %909
    %v913 = vsel %vm493, %v851, %v892
    %v914 = vsel %vm493, %v856, %v894
    %vm915 = vcmask 130048
    %v916 = vsel %vm915, %v913, %v900
    %v917 = vsel %vm915, %v914, %v902
    %vm918 = vcmask 195584
    %v919 = vsel %vm918, %v916, %v908
    %v920 = vsel %vm918, %v917, %v910
    %v921 = vld [vmem:[%s12] sm:$0xff]
    %v922 = vld [vmem:[%s12 + $0x8] sm:$0xff]
    %v923 = vld [vmem:[%s12 + $0x10] sm:$0xff]
    %v924 = vld [vmem:[%s12 + $0x18] sm:$0xff]
    %v925 = vld [vmem:[#allocation19] sm:$0x1]
    %v927 = vlaneseq
    %v928 = vshrl.u32 %v927, 7
    %v929 = vsub.s32 0, %v928
    %v930 = vrot.slane %v925, %v929
    %v933 = vsel %vm313, %v919, 0
    %v936 = vsel %vm313, %v920, 0
    %938 = vmatprep.subr.mxu0 0.0
    %939 = vmatpush1.msra.mxu0 %v921
    %940 = vmatprep.subr.mxu0 0.0
    %941 = vmatpush1.msra.mxu0 %v922
    %942 = vmatprep.subr.mxu0 0.0
    %943 = vmatpush1.msra.mxu0 %v923
    %944 = vmatprep.subr.mxu0 0.0
    %945 = vmatpush1.msra.mxu0 %v924
    %946 = vmatprep.subr.mxu0 0.0
    %947 = vmatpush1.msra.mxu0 0.0
    %948 = vmatprep.subr.mxu0 0.0
    %949 = vmatpush1.msra.mxu0 0.0
    %950 = vmatprep.subr.mxu0 0.0
    %951 = vmatpush1.msra.mxu0 0.0
    %952 = vmatprep.subr.mxu0 0.0
    %953 = vmatpush1.msra.mxu0 0.0
    %954 = vmatprep.subr.mxu0 0.0
    %955 = vmatpush1.msra.mxu0 0.0
    %956 = vmatprep.subr.mxu0 0.0
    %957 = vmatpush1.msra.mxu0 0.0
    %958 = vmatprep.subr.mxu0 0.0
    %959 = vmatpush1.msra.mxu0 0.0
    %960 = vmatprep.subr.mxu0 0.0
    %961 = vmatpush1.msra.mxu0 0.0
    %962 = vmatprep.subr.mxu0 0.0
    %963 = vmatpush1.msra.mxu0 0.0
    %964 = vmatprep.subr.mxu0 0.0
    %965 = vmatpush1.msra.mxu0 0.0
    %966 = vmatprep.subr.mxu0 0.0
    %967 = vmatpush1.msra.mxu0 0.0
    %968 = vmatprep.subr.mxu0 0.0
    %969 = vmatpush1.msra.mxu0 0.0
    %970 = vmatprep.subr.mxu0 0.0
    %971 = vmatpush1.msra.mxu0 0.0
    %972 = vmatprep.subr.mxu0 0.0
    %973 = vmatpush1.msra.mxu0 0.0
    %974 = vmatprep.subr.mxu0 0.0
    %975 = vmatpush1.msra.mxu0 0.0
    %976 = vmatprep.subr.mxu0 0.0
    %977 = vmatpush1.msra.mxu0 0.0
    %978 = vmatprep.subr.mxu0 0.0
    %979 = vmatpush1.msra.mxu0 0.0
    %980 = vmatprep.subr.mxu0 0.0
    %981 = vmatpush1.msra.mxu0 0.0
    %982 = vmatprep.subr.mxu0 0.0
    %983 = vmatpush1.msra.mxu0 0.0
    %984 = vmatprep.subr.mxu0 0.0
    %985 = vmatpush1.msra.mxu0 0.0
    %986 = vmatprep.subr.mxu0 0.0
    %987 = vmatpush1.msra.mxu0 0.0
    %988 = vmatprep.subr.mxu0 0.0
    %989 = vmatpush1.msra.mxu0 0.0
    %990 = vmatprep.subr.mxu0 0.0
    %991 = vmatpush1.msra.mxu0 0.0
    %992 = vmatprep.subr.mxu0 0.0
    %993 = vmatpush1.msra.mxu0 0.0
    %994 = vmatprep.subr.mxu0 0.0
    %995 = vmatpush1.msra.mxu0 0.0
    %996 = vmatprep.subr.mxu0 0.0
    %997 = vmatpush1.msra.mxu0 0.0
    %998 = vmatprep.subr.mxu0 0.0
    %999 = vmatpush1.msra.mxu0 0.0
    %1000 = vmatprep.subr.mxu0 0.0
    %1001 = vmatpush1.msra.mxu0 0.0
    %1002 = vmatprep.mubr.f32.mxu0 0.0
    %1003 = vmatmul.mubr.f32.gmra.mrb[0].mxu0 %v933
    %v1004 = vpop.f32.mrb[0].mxu0
    %v1005 = vadd.f32 %v930, %v1004
    %v1006 = vpop.f32.mrb[0].mxu0
    %1007 = vmatprep.mubr.f32.mxu0 0.0
    %1008 = vmatmul.mubr.f32.gmra.mrb[0].mxu0 %v936
    %v1009 = vpop.f32.mrb[0].mxu0
    %v1010 = vadd.f32 %v930, %v1009
    %v1011 = vpop.f32.mrb[0].mxu0
    %1012 = vdwg.mxu0
    %v1013 = vadd.f32 %v291, %v1005
    %v1014 = vadd.f32 %v292, %v1010
    %v1015 = vld [vmem:[#allocation23] sm:$0xff]
    %v1016 = vld [vmem:[#allocation23 + $0x8] sm:$0xff]
    %v1017 = vld [vmem:[#allocation23 + $0x10] sm:$0xff]
    %v1018 = vld [vmem:[#allocation23 + $0x18] sm:$0xff]
    %v1019 = vld [vmem:[#allocation25] sm:$0x1]
    %v1021 = vlaneseq
    %v1022 = vshrl.u32 %v1021, 7
    %v1023 = vsub.s32 0, %v1022
    %v1024 = vrot.slane %v1019, %v1023
    %v1027 = vsel %vm313, %v293, 0
    %v1030 = vsel %vm313, %v294, 0
    %1032 = vmatprep.subr.mxu0 0.0
    %1033 = vmatpush1.msra.mxu0 %v1015
    %1034 = vmatprep.subr.mxu0 0.0
    %1035 = vmatpush1.msra.mxu0 %v1016
    %1036 = vmatprep.subr.mxu0 0.0
    %1037 = vmatpush1.msra.mxu0 %v1017
    %1038 = vmatprep.subr.mxu0 0.0
    %1039 = vmatpush1.msra.mxu0 %v1018
    %1040 = vmatprep.subr.mxu0 0.0
    %1041 = vmatpush1.msra.mxu0 0.0
    %1042 = vmatprep.subr.mxu0 0.0
    %1043 = vmatpush1.msra.mxu0 0.0
    %1044 = vmatprep.subr.mxu0 0.0
    %1045 = vmatpush1.msra.mxu0 0.0
    %1046 = vmatprep.subr.mxu0 0.0
    %1047 = vmatpush1.msra.mxu0 0.0
    %1048 = vmatprep.subr.mxu0 0.0
    %1049 = vmatpush1.msra.mxu0 0.0
    %1050 = vmatprep.subr.mxu0 0.0
    %1051 = vmatpush1.msra.mxu0 0.0
    %1052 = vmatprep.subr.mxu0 0.0
    %1053 = vmatpush1.msra.mxu0 0.0
    %1054 = vmatprep.subr.mxu0 0.0
    %1055 = vmatpush1.msra.mxu0 0.0
    %1056 = vmatprep.subr.mxu0 0.0
    %1057 = vmatpush1.msra.mxu0 0.0
    %1058 = vmatprep.subr.mxu0 0.0
    %1059 = vmatpush1.msra.mxu0 0.0
    %1060 = vmatprep.subr.mxu0 0.0
    %1061 = vmatpush1.msra.mxu0 0.0
    %1062 = vmatprep.subr.mxu0 0.0
    %1063 = vmatpush1.msra.mxu0 0.0
    %1064 = vmatprep.subr.mxu0 0.0
    %1065 = vmatpush1.msra.mxu0 0.0
    %1066 = vmatprep.subr.mxu0 0.0
    %1067 = vmatpush1.msra.mxu0 0.0
    %1068 = vmatprep.subr.mxu0 0.0
    %1069 = vmatpush1.msra.mxu0 0.0
    %1070 = vmatprep.subr.mxu0 0.0
    %1071 = vmatpush1.msra.mxu0 0.0
    %1072 = vmatprep.subr.mxu0 0.0
    %1073 = vmatpush1.msra.mxu0 0.0
    %1074 = vmatprep.subr.mxu0 0.0
    %1075 = vmatpush1.msra.mxu0 0.0
    %1076 = vmatprep.subr.mxu0 0.0
    %1077 = vmatpush1.msra.mxu0 0.0
    %1078 = vmatprep.subr.mxu0 0.0
    %1079 = vmatpush1.msra.mxu0 0.0
    %1080 = vmatprep.subr.mxu0 0.0
    %1081 = vmatpush1.msra.mxu0 0.0
    %1082 = vmatprep.subr.mxu0 0.0
    %1083 = vmatpush1.msra.mxu0 0.0
    %1084 = vmatprep.subr.mxu0 0.0
    %1085 = vmatpush1.msra.mxu0 0.0
    %1086 = vmatprep.subr.mxu0 0.0
    %1087 = vmatpush1.msra.mxu0 0.0
    %1088 = vmatprep.subr.mxu0 0.0
    %1089 = vmatpush1.msra.mxu0 0.0
    %1090 = vmatprep.subr.mxu0 0.0
    %1091 = vmatpush1.msra.mxu0 0.0
    %1092 = vmatprep.subr.mxu0 0.0
    %1093 = vmatpush1.msra.mxu0 0.0
    %1094 = vmatprep.subr.mxu0 0.0
    %1095 = vmatpush1.msra.mxu0 0.0
    %1096 = vmatprep.mubr.f32.mxu0 0.0
    %1097 = vmatmul.mubr.f32.gmra.mrb[0].mxu0 %v1027
    %v1098 = vpop.f32.mrb[0].mxu0
    %v1099 = vadd.f32 %v1024, %v1098
    %v1100 = vpop.f32.mrb[0].mxu0
    %1101 = vmatprep.mubr.f32.mxu0 0.0
    %1102 = vmatmul.mubr.f32.gmra.mrb[0].mxu0 %v1030
    %v1103 = vpop.f32.mrb[0].mxu0
    %v1104 = vadd.f32 %v1024, %v1103
    %v1105 = vpop.f32.mrb[0].mxu0
    %1106 = vdwg.mxu0
    %1109 = vrot.lane.b32.xlu0 %v1099, 120
    %v1110 = vpop.permute.xlu0 %1109
    %1111 = vrot.lane.b32.xlu0 %v1104, 120
    %v1112 = vpop.permute.xlu0 %1111
    %1113 = vrot.lane.b32.xlu0 %v1099, 112
    %v1114 = vpop.permute.xlu0 %1113
    %1115 = vrot.lane.b32.xlu0 %v1104, 112
    %v1116 = vpop.permute.xlu0 %1115
    %1117 = vrot.lane.b32.xlu0 %v1099, 104
    %v1118 = vpop.permute.xlu0 %1117
    %1119 = vrot.lane.b32.xlu0 %v1104, 104
    %v1120 = vpop.permute.xlu0 %1119
    %v1121 = vld [vmem:[#allocation20] sm:$0xff]
    %v1122 = vld [vmem:[#allocation20 + $0x8] sm:$0xff]
    %v1123 = vld [vmem:[#allocation20 + $0x10] sm:$0xff]
    %v1124 = vld [vmem:[#allocation20 + $0x18] sm:$0xff]
    %v1125 = vld [vmem:[#allocation22] sm:$0x1]
    %v1127 = vlaneseq
    %v1128 = vshrl.u32 %v1127, 7
    %v1129 = vsub.s32 0, %v1128
    %v1130 = vrot.slane %v1125, %v1129
    %v1133 = vsel %vm313, %v1013, 0
    %v1136 = vsel %vm313, %v1014, 0
    %1138 = vmatprep.subr.mxu0 0.0
    %1139 = vmatpush1.msra.mxu0 %v1121
    %1140 = vmatprep.subr.mxu0 0.0
    %1141 = vmatpush1.msra.mxu0 %v1122
    %1142 = vmatprep.subr.mxu0 0.0
    %1143 = vmatpush1.msra.mxu0 %v1123
    %1144 = vmatprep.subr.mxu0 0.0
    %1145 = vmatpush1.msra.mxu0 %v1124
    %1146 = vmatprep.subr.mxu0 0.0
    %1147 = vmatpush1.msra.mxu0 0.0
    %1148 = vmatprep.subr.mxu0 0.0
    %1149 = vmatpush1.msra.mxu0 0.0
    %1150 = vmatprep.subr.mxu0 0.0
    %1151 = vmatpush1.msra.mxu0 0.0
    %1152 = vmatprep.subr.mxu0 0.0
    %1153 = vmatpush1.msra.mxu0 0.0
    %1154 = vmatprep.subr.mxu0 0.0
    %1155 = vmatpush1.msra.mxu0 0.0
    %1156 = vmatprep.subr.mxu0 0.0
    %1157 = vmatpush1.msra.mxu0 0.0
    %1158 = vmatprep.subr.mxu0 0.0
    %1159 = vmatpush1.msra.mxu0 0.0
    %1160 = vmatprep.subr.mxu0 0.0
    %1161 = vmatpush1.msra.mxu0 0.0
    %1162 = vmatprep.subr.mxu0 0.0
    %1163 = vmatpush1.msra.mxu0 0.0
    %1164 = vmatprep.subr.mxu0 0.0
    %1165 = vmatpush1.msra.mxu0 0.0
    %1166 = vmatprep.subr.mxu0 0.0
    %1167 = vmatpush1.msra.mxu0 0.0
    %1168 = vmatprep.subr.mxu0 0.0
    %1169 = vmatpush1.msra.mxu0 0.0
    %1170 = vmatprep.subr.mxu0 0.0
    %1171 = vmatpush1.msra.mxu0 0.0
    %1172 = vmatprep.subr.mxu0 0.0
    %1173 = vmatpush1.msra.mxu0 0.0
    %1174 = vmatprep.subr.mxu0 0.0
    %1175 = vmatpush1.msra.mxu0 0.0
    %1176 = vmatprep.subr.mxu0 0.0
    %1177 = vmatpush1.msra.mxu0 0.0
    %1178 = vmatprep.subr.mxu0 0.0
    %1179 = vmatpush1.msra.mxu0 0.0
    %1180 = vmatprep.subr.mxu0 0.0
    %1181 = vmatpush1.msra.mxu0 0.0
    %1182 = vmatprep.subr.mxu0 0.0
    %1183 = vmatpush1.msra.mxu0 0.0
    %1184 = vmatprep.subr.mxu0 0.0
    %1185 = vmatpush1.msra.mxu0 0.0
    %1186 = vmatprep.subr.mxu0 0.0
    %1187 = vmatpush1.msra.mxu0 0.0
    %1188 = vmatprep.subr.mxu0 0.0
    %1189 = vmatpush1.msra.mxu0 0.0
    %1190 = vmatprep.subr.mxu0 0.0
    %1191 = vmatpush1.msra.mxu0 0.0
    %1192 = vmatprep.subr.mxu0 0.0
    %1193 = vmatpush1.msra.mxu0 0.0
    %1194 = vmatprep.subr.mxu0 0.0
    %1195 = vmatpush1.msra.mxu0 0.0
    %1196 = vmatprep.subr.mxu0 0.0
    %1197 = vmatpush1.msra.mxu0 0.0
    %1198 = vmatprep.subr.mxu0 0.0
    %1199 = vmatpush1.msra.mxu0 0.0
    %1200 = vmatprep.subr.mxu0 0.0
    %1201 = vmatpush1.msra.mxu0 0.0
    %1202 = vmatprep.mubr.f32.mxu0 0.0
    %1203 = vmatmul.mubr.f32.gmra.mrb[0].mxu0 %v1133
    %v1204 = vpop.f32.mrb[0].mxu0
    %v1205 = vadd.f32 %v1130, %v1204
    %v1206 = vpop.f32.mrb[0].mxu0
    %1207 = vmatprep.mubr.f32.mxu0 0.0
    %1208 = vmatmul.mubr.f32.gmra.mrb[0].mxu0 %v1136
    %v1209 = vpop.f32.mrb[0].mxu0
    %v1210 = vadd.f32 %v1130, %v1209
    %v1211 = vpop.f32.mrb[0].mxu0
    %1212 = vdwg.mxu0
    %1215 = vrot.lane.b32.xlu0 %v1205, 120
    %v1216 = vpop.permute.xlu0 %1215
    %1217 = vrot.lane.b32.xlu0 %v1210, 120
    %v1218 = vpop.permute.xlu0 %1217
    %1219 = vrot.lane.b32.xlu0 %v1205, 112
    %v1220 = vpop.permute.xlu0 %1219
    %1221 = vrot.lane.b32.xlu0 %v1210, 112
    %v1222 = vpop.permute.xlu0 %1221
    %1223 = vrot.lane.b32.xlu0 %v1205, 104
    %v1224 = vpop.permute.xlu0 %1223
    %1225 = vrot.lane.b32.xlu0 %v1210, 104
    %v1226 = vpop.permute.xlu0 %1225
    %v1227 = vsel %vm493, %v1205, 0
    %v1229 = vsel %vm493, %v1210, 0
    %v1231 = vsel %vm493, %v1216, 0
    %v1233 = vsel %vm493, %v1218, 0
    %v1235 = vsel %vm493, %v1220, 0
    %v1237 = vsel %vm493, %v1222, 0
    %v1239 = vsel %vm493, %v1224, 0
    %v1241 = vsel %vm493, %v1226, 0
    %v1243 = vsel %vm493, %v1099, 0
    %v1245 = vsel %vm493, %v1104, 0
    %v1247 = vsel %vm493, %v1110, 0
    %v1249 = vsel %vm493, %v1112, 0
    %v1251 = vsel %vm493, %v1114, 0
    %v1253 = vsel %vm493, %v1116, 0
    %v1255 = vsel %vm493, %v1118, 0
    %v1257 = vsel %vm493, %v1120, 0
    %1259 = vmatprep.subr.mxu0 0.0
    %1260 = vmatpush1.xpose.msra.mxu0 %v1243
    %1261 = vmatprep.subr.mxu0 0.0
    %1262 = vmatpush1.xpose.msra.mxu0 %v1245
    %1263 = vmatprep.subr.mxu0 0.0
    %1264 = vmatpush1.xpose.msra.mxu0 %v1247
    %1265 = vmatprep.subr.mxu0 0.0
    %1266 = vmatpush1.xpose.msra.mxu0 %v1249
    %1267 = vmatprep.subr.mxu0 0.0
    %1268 = vmatpush1.xpose.msra.mxu0 %v1251
    %1269 = vmatprep.subr.mxu0 0.0
    %1270 = vmatpush1.xpose.msra.mxu0 %v1253
    %1271 = vmatprep.subr.mxu0 0.0
    %1272 = vmatpush1.xpose.msra.mxu0 %v1255
    %1273 = vmatprep.subr.mxu0 0.0
    %1274 = vmatpush1.xpose.msra.mxu0 %v1257
    %1275 = vmatprep.subr.mxu0 0.0
    %1276 = vmatpush1.xpose.msra.mxu0 0.0
    %1277 = vmatprep.subr.mxu0 0.0
    %1278 = vmatpush1.xpose.msra.mxu0 0.0
    %1279 = vmatprep.subr.mxu0 0.0
    %1280 = vmatpush1.xpose.msra.mxu0 0.0
    %1281 = vmatprep.subr.mxu0 0.0
    %1282 = vmatpush1.xpose.msra.mxu0 0.0
    %1283 = vmatprep.subr.mxu0 0.0
    %1284 = vmatpush1.xpose.msra.mxu0 0.0
    %1285 = vmatprep.subr.mxu0 0.0
    %1286 = vmatpush1.xpose.msra.mxu0 0.0
    %1287 = vmatprep.subr.mxu0 0.0
    %1288 = vmatpush1.xpose.msra.mxu0 0.0
    %1289 = vmatprep.subr.mxu0 0.0
    %1290 = vmatpush1.xpose.msra.mxu0 0.0
    %1291 = vmatprep.subr.mxu0 0.0
    %1292 = vmatpush1.xpose.msra.mxu0 0.0
    %1293 = vmatprep.subr.mxu0 0.0
    %1294 = vmatpush1.xpose.msra.mxu0 0.0
    %1295 = vmatprep.subr.mxu0 0.0
    %1296 = vmatpush1.xpose.msra.mxu0 0.0
    %1297 = vmatprep.subr.mxu0 0.0
    %1298 = vmatpush1.xpose.msra.mxu0 0.0
    %1299 = vmatprep.subr.mxu0 0.0
    %1300 = vmatpush1.xpose.msra.mxu0 0.0
    %1301 = vmatprep.subr.mxu0 0.0
    %1302 = vmatpush1.xpose.msra.mxu0 0.0
    %1303 = vmatprep.subr.mxu0 0.0
    %1304 = vmatpush1.xpose.msra.mxu0 0.0
    %1305 = vmatprep.subr.mxu0 0.0
    %1306 = vmatpush1.xpose.msra.mxu0 0.0
    %1307 = vmatprep.subr.mxu0 0.0
    %1308 = vmatpush1.xpose.msra.mxu0 0.0
    %1309 = vmatprep.subr.mxu0 0.0
    %1310 = vmatpush1.xpose.msra.mxu0 0.0
    %1311 = vmatprep.subr.mxu0 0.0
    %1312 = vmatpush1.xpose.msra.mxu0 0.0
    %1313 = vmatprep.subr.mxu0 0.0
    %1314 = vmatpush1.xpose.msra.mxu0 0.0
    %1315 = vmatprep.subr.mxu0 0.0
    %1316 = vmatpush1.xpose.msra.mxu0 0.0
    %1317 = vmatprep.subr.mxu0 0.0
    %1318 = vmatpush1.xpose.msra.mxu0 0.0
    %1319 = vmatprep.subr.mxu0 0.0
    %1320 = vmatpush1.xpose.msra.mxu0 0.0
    %1321 = vmatprep.subr.mxu0 0.0
    %1322 = vmatpush1.xpose.msra.mxu0 0.0
    %1323 = vmatprep.mubr.f32.mxu0 0.0
    %1324 = vmatmul.mubr.f32.gmra.mrb[0].mxu0 %v1227
    %v1325 = vpop.f32.mrb[0].mxu0
    %v1326 = vadd.f32 0.0, %v1325
    %v1327 = vpop.f32.mrb[0].mxu0
    %1328 = vmatprep.mubr.f32.mxu0 0.0
    %1329 = vmatmul.mubr.f32.gmra.mrb[0].mxu0 %v1229
    %v1330 = vpop.f32.mrb[0].mxu0
    %v1331 = vadd.f32 0.0, %v1330
    %v1332 = vpop.f32.mrb[0].mxu0
    %1333 = vmatprep.mubr.f32.mxu0 0.0
    %1334 = vmatmul.mubr.f32.gmra.mrb[0].mxu0 %v1231
    %v1335 = vpop.f32.mrb[0].mxu0
    %v1336 = vadd.f32 0.0, %v1335
    %v1337 = vpop.f32.mrb[0].mxu0
    %1338 = vmatprep.mubr.f32.mxu0 0.0
    %1339 = vmatmul.mubr.f32.gmra.mrb[0].mxu0 %v1233
    %v1340 = vpop.f32.mrb[0].mxu0
    %v1341 = vadd.f32 0.0, %v1340
    %v1342 = vpop.f32.mrb[0].mxu0
    %1343 = vmatprep.mubr.f32.mxu0 0.0
    %1344 = vmatmul.mubr.f32.gmra.mrb[0].mxu0 %v1235
    %v1345 = vpop.f32.mrb[0].mxu0
    %v1346 = vadd.f32 0.0, %v1345
    %v1347 = vpop.f32.mrb[0].mxu0
    %1348 = vmatprep.mubr.f32.mxu0 0.0
    %1349 = vmatmul.mubr.f32.gmra.mrb[0].mxu0 %v1237
    %v1350 = vpop.f32.mrb[0].mxu0
    %v1351 = vadd.f32 0.0, %v1350
    %v1352 = vpop.f32.mrb[0].mxu0
    %1353 = vmatprep.mubr.f32.mxu0 0.0
    %1354 = vmatmul.mubr.f32.gmra.mrb[0].mxu0 %v1239
    %v1355 = vpop.f32.mrb[0].mxu0
    %v1356 = vadd.f32 0.0, %v1355
    %v1357 = vpop.f32.mrb[0].mxu0
    %1358 = vmatprep.mubr.f32.mxu0 0.0
    %1359 = vmatmul.mubr.f32.gmra.mrb[0].mxu0 %v1241
    %v1360 = vpop.f32.mrb[0].mxu0
    %v1361 = vadd.f32 0.0, %v1360
    %v1362 = vpop.f32.mrb[0].mxu0
    %1363 = vdwg.mxu0
    %v1364 = vmul.f32 %v1326, 0.35355338
    %v1365 = vmul.f32 %v1331, 0.35355338
    %v1366 = vmul.f32 %v1336, 0.35355338
    %v1367 = vmul.f32 %v1341, 0.35355338
    %v1368 = vmul.f32 %v1346, 0.35355338
    %v1369 = vmul.f32 %v1351, 0.35355338
    %v1370 = vmul.f32 %v1356, 0.35355338
    %v1371 = vmul.f32 %v1361, 0.35355338
    %v1372 = vadd.f32 %v1364, %v303
    %v1373 = vadd.f32 %v1365, %v304
    %v1374 = vadd.f32 %v1366, %v305
    %v1375 = vadd.f32 %v1367, %v306
    %v1376 = vadd.f32 %v1368, %v307
    %v1377 = vadd.f32 %v1369, %v308
    %v1378 = vadd.f32 %v1370, %v309
    %v1379 = vadd.f32 %v1371, %v310
    %v1380 = vsel %vm647, %v1372, -inf
    %1381 = vmax.xlane.f32.xlu0 %v1380
    %v1382 = vpop.xlane.xlu0 %1381
    %v1383 = vsel %vm647, %v1373, -inf
    %1384 = vmax.xlane.f32.xlu0 %v1383
    %v1385 = vpop.xlane.xlu0 %1384
    %v1386 = vsel %vm647, %v1374, -inf
    %1387 = vmax.xlane.f32.xlu0 %v1386
    %v1388 = vpop.xlane.xlu0 %1387
    %v1389 = vsel %vm647, %v1375, -inf
    %1390 = vmax.xlane.f32.xlu0 %v1389
    %v1391 = vpop.xlane.xlu0 %1390
    %v1392 = vsel %vm647, %v1376, -inf
    %1393 = vmax.xlane.f32.xlu0 %v1392
    %v1394 = vpop.xlane.xlu0 %1393
    %v1395 = vsel %vm647, %v1377, -inf
    %1396 = vmax.xlane.f32.xlu0 %v1395
    %v1397 = vpop.xlane.xlu0 %1396
    %v1398 = vsel %vm647, %v1378, -inf
    %1399 = vmax.xlane.f32.xlu0 %v1398
    %v1400 = vpop.xlane.xlu0 %1399
    %v1401 = vsel %vm647, %v1379, -inf
    %1402 = vmax.xlane.f32.xlu0 %v1401
    %v1403 = vpop.xlane.xlu0 %1402
    %v1404 = vsub.f32 %v1372, %v1382
    %v1405 = vsub.f32 %v1373, %v1385
    %v1406 = vsub.f32 %v1374, %v1388
    %v1407 = vsub.f32 %v1375, %v1391
    %v1408 = vsub.f32 %v1376, %v1394
    %v1409 = vsub.f32 %v1377, %v1397
    %v1410 = vsub.f32 %v1378, %v1400
    %v1411 = vsub.f32 %v1379, %v1403
    %v1412 = vmul.f32 %v1404, 1.442695
    %v1413 = vpow.pop %v1412
    %v1414 = vmul.f32 %v1405, 1.442695
    %v1415 = vpow.pop %v1414
    %v1416 = vmul.f32 %v1406, 1.442695
    %v1417 = vpow.pop %v1416
    %v1418 = vmul.f32 %v1407, 1.442695
    %v1419 = vpow.pop %v1418
    %v1420 = vmul.f32 %v1408, 1.442695
    %v1421 = vpow.pop %v1420
    %v1422 = vmul.f32 %v1409, 1.442695
    %v1423 = vpow.pop %v1422
    %v1424 = vmul.f32 %v1410, 1.442695
    %v1425 = vpow.pop %v1424
    %v1426 = vmul.f32 %v1411, 1.442695
    %v1427 = vpow.pop %v1426
    %v1428 = vsel %vm647, %v1413, 0.0
    %1429 = vadd.xlane.f32.xlu0 %v1428
    %v1430 = vpop.xlane.xlu0 %1429
    %v1431 = vsel %vm647, %v1415, 0.0
    %1432 = vadd.xlane.f32.xlu0 %v1431
    %v1433 = vpop.xlane.xlu0 %1432
    %v1434 = vsel %vm647, %v1417, 0.0
    %1435 = vadd.xlane.f32.xlu0 %v1434
    %v1436 = vpop.xlane.xlu0 %1435
    %v1437 = vsel %vm647, %v1419, 0.0
    %1438 = vadd.xlane.f32.xlu0 %v1437
    %v1439 = vpop.xlane.xlu0 %1438
    %v1440 = vsel %vm647, %v1421, 0.0
    %1441 = vadd.xlane.f32.xlu0 %v1440
    %v1442 = vpop.xlane.xlu0 %1441
    %v1443 = vsel %vm647, %v1423, 0.0
    %1444 = vadd.xlane.f32.xlu0 %v1443
    %v1445 = vpop.xlane.xlu0 %1444
    %v1446 = vsel %vm647, %v1425, 0.0
    %1447 = vadd.xlane.f32.xlu0 %v1446
    %v1448 = vpop.xlane.xlu0 %1447
    %v1449 = vsel %vm647, %v1427, 0.0
    %1450 = vadd.xlane.f32.xlu0 %v1449
    %v1451 = vpop.xlane.xlu0 %1450
    %v1452 = vrcp.pop %v1430
    %v1453 = vrcp.pop %v1433
    %v1454 = vrcp.pop %v1436
    %v1455 = vrcp.pop %v1439
    %v1456 = vrcp.pop %v1442
    %v1457 = vrcp.pop %v1445
    %v1458 = vrcp.pop %v1448
    %v1459 = vrcp.pop %v1451
    %v1460 = vmul.f32 %v1413, %v1452
    %v1461 = vmul.f32 %v1415, %v1453
    %v1462 = vmul.f32 %v1417, %v1454
    %v1463 = vmul.f32 %v1419, %v1455
    %v1464 = vmul.f32 %v1421, %v1456
    %v1465 = vmul.f32 %v1423, %v1457
    %v1466 = vmul.f32 %v1425, %v1458
    %v1467 = vmul.f32 %v1427, %v1459
    %1469 = vrot.lane.b32.xlu0 %v1462, 120
    %v1470 = vpop.permute.xlu0 %1469
    %1473 = vrot.lane.b32.xlu0 %v1464, 112
    %v1474 = vpop.permute.xlu0 %1473
    %1477 = vrot.lane.b32.xlu0 %v1466, 104
    %v1478 = vpop.permute.xlu0 %1477
    %v1480 = vsel %vm493, %v1460, %v1470
    %v1481 = vsel %vm915, %v1480, %v1474
    %v1482 = vsel %vm918, %v1481, %v1478
    %1484 = vrot.lane.b32.xlu0 %v1461, 120
    %v1485 = vpop.permute.xlu0 %1484
    %1488 = vrot.lane.b32.xlu0 %v1463, 112
    %v1489 = vpop.permute.xlu0 %1488
    %1492 = vrot.lane.b32.xlu0 %v1465, 104
    %v1493 = vpop.permute.xlu0 %1492
    %1496 = vrot.lane.b32.xlu0 %v1467, 96
    %v1497 = vpop.permute.xlu0 %1496
    %v1499 = vsel %vm493, %v1485, %v1489
    %v1500 = vsel %vm915, %v1499, %v1493
    %v1501 = vsel %vm918, %v1500, %v1497
    %1502 = vst.msk [vmem:[#allocation30] sm:$0xff] %vm313, %v1482
    %1503 = vst.msk [vmem:[#allocation30 + $0x8] sm:$0xff] %vm313, %v1501
    %v1504 = vld [vmem:[#allocation11] sm:$0x1]
    %v1505 = vld [vmem:[#allocation13] sm:$0x1]
    %v1506 = vsel %vm313, %v1013, 0.0
    %1507 = vadd.xlane.f32.xlu0 %v1506
    %v1508 = vpop.xlane.xlu0 %1507
    %v1509 = vsel %vm313, %v1014, 0.0
    %1510 = vadd.xlane.f32.xlu0 %v1509
    %v1511 = vpop.xlane.xlu0 %1510
    %v1512 = vmul.f32 %v1508, %v320
    %v1513 = vmul.f32 %v1511, %v320
    %v1514 = vsub.f32 %v1013, %v1512
    %v1515 = vsub.f32 %v1014, %v1513
    %v1516 = vmul.f32 %v1514, %v1514
    %v1517 = vmul.f32 %v1515, %v1515
    %v1518 = vsel %vm313, %v1516, 0.0
    %1519 = vadd.xlane.f32.xlu0 %v1518
    %v1520 = vpop.xlane.xlu0 %1519
    %v1521 = vsel %vm313, %v1517, 0.0
    %1522 = vadd.xlane.f32.xlu0 %v1521
    %v1523 = vpop.xlane.xlu0 %1522
    %v1524 = vmul.f32 %v1520, 0.032258064
    %v1525 = vmul.f32 %v1523, 0.032258064
    %v1526 = vrsqrt.pop %v1524
    %v1527 = vmul.f32 %v1524, %v1526
    %vm1528 = vcmp.eq.f32.partialorder %v1524, inf
    %v1529 = vsel %vm1528, %v1524, %v1527
    %vm1530 = vcmp.eq.f32.partialorder %v1524, 0.0
    %v1531 = vand.u32 %v1524, 2147483648
    %v1532 = vsel %vm1530, %v1531, %v1529
    %v1533 = vrsqrt.pop %v1525
    %v1534 = vmul.f32 %v1525, %v1533
    %vm1535 = vcmp.eq.f32.partialorder %v1525, inf
    %v1536 = vsel %vm1535, %v1525, %v1534
    %vm1537 = vcmp.eq.f32.partialorder %v1525, 0.0
    %v1538 = vand.u32 %v1525, 2147483648
    %v1539 = vsel %vm1537, %v1538, %v1536
    %v1540 = vadd.f32 %v1532, 1e-06
    %v1541 = vadd.f32 %v1539, 1e-06
    %v1542 = vrcp.pop %v1540
    %v1543 = vrcp.pop %v1541
    %v1545 = vlaneseq
    %v1546 = vshrl.u32 %v1545, 7
    %v1547 = vsub.s32 0, %v1546
    %v1548 = vrot.slane %v1504, %v1547
    %v1550 = vmul.f32 %v1548, %v1514
    %v1551 = vmul.f32 %v1548, %v1515
    %v1552 = vmul.f32 %v1550, %v1542
    %v1553 = vmul.f32 %v1551, %v1543
    %v1555 = vlaneseq
    %v1556 = vshrl.u32 %v1555, 7
    %v1557 = vsub.s32 0, %v1556
    %v1558 = vrot.slane %v1505, %v1557
    %v1560 = vadd.f32 %v1552, %v1558
    %v1561 = vadd.f32 %v1553, %v1558
    %v1562 = vld [vmem:[#allocation20] sm:$0xff]
    %v1563 = vld [vmem:[#allocation20 + $0x8] sm:$0xff]
    %v1564 = vld [vmem:[#allocation20 + $0x10] sm:$0xff]
    %v1565 = vld [vmem:[#allocation20 + $0x18] sm:$0xff]
    %v1566 = vld [vmem:[#allocation22] sm:$0x1]
    %v1568 = vlaneseq
    %v1569 = vshrl.u32 %v1568, 7
    %v1570 = vsub.s32 0, %v1569
    %v1571 = vrot.slane %v1566, %v1570
    %v1574 = vsel %vm313, %v1560, 0
    %v1577 = vsel %vm313, %v1561, 0
    %1579 = vmatprep.subr.mxu0 0.0
    %1580 = vmatpush1.msra.mxu0 %v1562
    %1581 = vmatprep.subr.mxu0 0.0
    %1582 = vmatpush1.msra.mxu0 %v1563
    %1583 = vmatprep.subr.mxu0 0.0
    %1584 = vmatpush1.msra.mxu0 %v1564
    %1585 = vmatprep.subr.mxu0 0.0
    %1586 = vmatpush1.msra.mxu0 %v1565
    %1587 = vmatprep.subr.mxu0 0.0
    %1588 = vmatpush1.msra.mxu0 0.0
    %1589 = vmatprep.subr.mxu0 0.0
    %1590 = vmatpush1.msra.mxu0 0.0
    %1591 = vmatprep.subr.mxu0 0.0
    %1592 = vmatpush1.msra.mxu0 0.0
    %1593 = vmatprep.subr.mxu0 0.0
    %1594 = vmatpush1.msra.mxu0 0.0
    %1595 = vmatprep.subr.mxu0 0.0
    %1596 = vmatpush1.msra.mxu0 0.0
    %1597 = vmatprep.subr.mxu0 0.0
    %1598 = vmatpush1.msra.mxu0 0.0
    %1599 = vmatprep.subr.mxu0 0.0
    %1600 = vmatpush1.msra.mxu0 0.0
    %1601 = vmatprep.subr.mxu0 0.0
    %1602 = vmatpush1.msra.mxu0 0.0
    %1603 = vmatprep.subr.mxu0 0.0
    %1604 = vmatpush1.msra.mxu0 0.0
    %1605 = vmatprep.subr.mxu0 0.0
    %1606 = vmatpush1.msra.mxu0 0.0
    %1607 = vmatprep.subr.mxu0 0.0
    %1608 = vmatpush1.msra.mxu0 0.0
    %1609 = vmatprep.subr.mxu0 0.0
    %1610 = vmatpush1.msra.mxu0 0.0
    %1611 = vmatprep.subr.mxu0 0.0
    %1612 = vmatpush1.msra.mxu0 0.0
    %1613 = vmatprep.subr.mxu0 0.0
    %1614 = vmatpush1.msra.mxu0 0.0
    %1615 = vmatprep.subr.mxu0 0.0
    %1616 = vmatpush1.msra.mxu0 0.0
    %1617 = vmatprep.subr.mxu0 0.0
    %1618 = vmatpush1.msra.mxu0 0.0
    %1619 = vmatprep.subr.mxu0 0.0
    %1620 = vmatpush1.msra.mxu0 0.0
    %1621 = vmatprep.subr.mxu0 0.0
    %1622 = vmatpush1.msra.mxu0 0.0
    %1623 = vmatprep.subr.mxu0 0.0
    %1624 = vmatpush1.msra.mxu0 0.0
    %1625 = vmatprep.subr.mxu0 0.0
    %1626 = vmatpush1.msra.mxu0 0.0
    %1627 = vmatprep.subr.mxu0 0.0
    %1628 = vmatpush1.msra.mxu0 0.0
    %1629 = vmatprep.subr.mxu0 0.0
    %1630 = vmatpush1.msra.mxu0 0.0
    %1631 = vmatprep.subr.mxu0 0.0
    %1632 = vmatpush1.msra.mxu0 0.0
    %1633 = vmatprep.subr.mxu0 0.0
    %1634 = vmatpush1.msra.mxu0 0.0
    %1635 = vmatprep.subr.mxu0 0.0
    %1636 = vmatpush1.msra.mxu0 0.0
    %1637 = vmatprep.subr.mxu0 0.0
    %1638 = vmatpush1.msra.mxu0 0.0
    %1639 = vmatprep.subr.mxu0 0.0
    %1640 = vmatpush1.msra.mxu0 0.0
    %1641 = vmatprep.subr.mxu0 0.0
    %1642 = vmatpush1.msra.mxu0 0.0
    %1643 = vmatprep.mubr.f32.mxu0 0.0
    %1644 = vmatmul.mubr.f32.gmra.mrb[0].mxu0 %v1574
    %v1645 = vpop.f32.mrb[0].mxu0
    %v1646 = vadd.f32 %v1571, %v1645
    %v1647 = vpop.f32.mrb[0].mxu0
    %1648 = vmatprep.mubr.f32.mxu0 0.0
    %1649 = vmatmul.mubr.f32.gmra.mrb[0].mxu0 %v1577
    %v1650 = vpop.f32.mrb[0].mxu0
    %v1651 = vadd.f32 %v1571, %v1650
    %v1652 = vpop.f32.mrb[0].mxu0
    %1653 = vdwg.mxu0
    %1656 = vrot.lane.b32.xlu0 %v1646, 120
    %v1657 = vpop.permute.xlu0 %1656
    %1658 = vrot.lane.b32.xlu0 %v1651, 120
    %v1659 = vpop.permute.xlu0 %1658
    %1660 = vrot.lane.b32.xlu0 %v1646, 112
    %v1661 = vpop.permute.xlu0 %1660
    %1662 = vrot.lane.b32.xlu0 %v1651, 112
    %v1663 = vpop.permute.xlu0 %1662
    %1664 = vrot.lane.b32.xlu0 %v1646, 104
    %v1665 = vpop.permute.xlu0 %1664
    %1666 = vrot.lane.b32.xlu0 %v1651, 104
    %v1667 = vpop.permute.xlu0 %1666
    %v1668 = vsel %vm493, %v1646, 0
    %v1670 = vsel %vm493, %v1651, 0
    %v1672 = vsel %vm493, %v1657, 0
    %v1674 = vsel %vm493, %v1659, 0
    %v1676 = vsel %vm493, %v1661, 0
    %v1678 = vsel %vm493, %v1663, 0
    %v1680 = vsel %vm493, %v1665, 0
    %v1682 = vsel %vm493, %v1667, 0
    %1684 = vmatprep.subr.mxu0 0.0
    %1685 = vmatpush1.xpose.msra.mxu0 %v1243
    %1686 = vmatprep.subr.mxu0 0.0
    %1687 = vmatpush1.xpose.msra.mxu0 %v1245
    %1688 = vmatprep.subr.mxu0 0.0
    %1689 = vmatpush1.xpose.msra.mxu0 %v1247
    %1690 = vmatprep.subr.mxu0 0.0
    %1691 = vmatpush1.xpose.msra.mxu0 %v1249
    %1692 = vmatprep.subr.mxu0 0.0
    %1693 = vmatpush1.xpose.msra.mxu0 %v1251
    %1694 = vmatprep.subr.mxu0 0.0
    %1695 = vmatpush1.xpose.msra.mxu0 %v1253
    %1696 = vmatprep.subr.mxu0 0.0
    %1697 = vmatpush1.xpose.msra.mxu0 %v1255
    %1698 = vmatprep.subr.mxu0 0.0
    %1699 = vmatpush1.xpose.msra.mxu0 %v1257
    %1700 = vmatprep.subr.mxu0 0.0
    %1701 = vmatpush1.xpose.msra.mxu0 0.0
    %1702 = vmatprep.subr.mxu0 0.0
    %1703 = vmatpush1.xpose.msra.mxu0 0.0
    %1704 = vmatprep.subr.mxu0 0.0
    %1705 = vmatpush1.xpose.msra.mxu0 0.0
    %1706 = vmatprep.subr.mxu0 0.0
    %1707 = vmatpush1.xpose.msra.mxu0 0.0
    %1708 = vmatprep.subr.mxu0 0.0
    %1709 = vmatpush1.xpose.msra.mxu0 0.0
    %1710 = vmatprep.subr.mxu0 0.0
    %1711 = vmatpush1.xpose.msra.mxu0 0.0
    %1712 = vmatprep.subr.mxu0 0.0
    %1713 = vmatpush1.xpose.msra.mxu0 0.0
    %1714 = vmatprep.subr.mxu0 0.0
    %1715 = vmatpush1.xpose.msra.mxu0 0.0
    %1716 = vmatprep.subr.mxu0 0.0
    %1717 = vmatpush1.xpose.msra.mxu0 0.0
    %1718 = vmatprep.subr.mxu0 0.0
    %1719 = vmatpush1.xpose.msra.mxu0 0.0
    %1720 = vmatprep.subr.mxu0 0.0
    %1721 = vmatpush1.xpose.msra.mxu0 0.0
    %1722 = vmatprep.subr.mxu0 0.0
    %1723 = vmatpush1.xpose.msra.mxu0 0.0
    %1724 = vmatprep.subr.mxu0 0.0
    %1725 = vmatpush1.xpose.msra.mxu0 0.0
    %1726 = vmatprep.subr.mxu0 0.0
    %1727 = vmatpush1.xpose.msra.mxu0 0.0
    %1728 = vmatprep.subr.mxu0 0.0
    %1729 = vmatpush1.xpose.msra.mxu0 0.0
    %1730 = vmatprep.subr.mxu0 0.0
    %1731 = vmatpush1.xpose.msra.mxu0 0.0
    %1732 = vmatprep.subr.mxu0 0.0
    %1733 = vmatpush1.xpose.msra.mxu0 0.0
    %1734 = vmatprep.subr.mxu0 0.0
    %1735 = vmatpush1.xpose.msra.mxu0 0.0
    %1736 = vmatprep.subr.mxu0 0.0
    %1737 = vmatpush1.xpose.msra.mxu0 0.0
    %1738 = vmatprep.subr.mxu0 0.0
    %1739 = vmatpush1.xpose.msra.mxu0 0.0
    %1740 = vmatprep.subr.mxu0 0.0
    %1741 = vmatpush1.xpose.msra.mxu0 0.0
    %1742 = vmatprep.subr.mxu0 0.0
    %1743 = vmatpush1.xpose.msra.mxu0 0.0
    %1744 = vmatprep.subr.mxu0 0.0
    %1745 = vmatpush1.xpose.msra.mxu0 0.0
    %1746 = vmatprep.subr.mxu0 0.0
    %1747 = vmatpush1.xpose.msra.mxu0 0.0
    %1748 = vmatprep.mubr.f32.mxu0 0.0
    %1749 = vmatmul.mubr.f32.gmra.mrb[0].mxu0 %v1668
    %v1750 = vpop.f32.mrb[0].mxu0
    %v1751 = vadd.f32 0.0, %v1750
    %v1752 = vpop.f32.mrb[0].mxu0
    %1753 = vmatprep.mubr.f32.mxu0 0.0
    %1754 = vmatmul.mubr.f32.gmra.mrb[0].mxu0 %v1670
    %v1755 = vpop.f32.mrb[0].mxu0
    %v1756 = vadd.f32 0.0, %v1755
    %v1757 = vpop.f32.mrb[0].mxu0
    %1758 = vmatprep.mubr.f32.mxu0 0.0
    %1759 = vmatmul.mubr.f32.gmra.mrb[0].mxu0 %v1672
    %v1760 = vpop.f32.mrb[0].mxu0
    %v1761 = vadd.f32 0.0, %v1760
    %v1762 = vpop.f32.mrb[0].mxu0
    %1763 = vmatprep.mubr.f32.mxu0 0.0
    %1764 = vmatmul.mubr.f32.gmra.mrb[0].mxu0 %v1674
    %v1765 = vpop.f32.mrb[0].mxu0
    %v1766 = vadd.f32 0.0, %v1765
    %v1767 = vpop.f32.mrb[0].mxu0
    %1768 = vmatprep.mubr.f32.mxu0 0.0
    %1769 = vmatmul.mubr.f32.gmra.mrb[0].mxu0 %v1676
    %v1770 = vpop.f32.mrb[0].mxu0
    %v1771 = vadd.f32 0.0, %v1770
    %v1772 = vpop.f32.mrb[0].mxu0
    %1773 = vmatprep.mubr.f32.mxu0 0.0
    %1774 = vmatmul.mubr.f32.gmra.mrb[0].mxu0 %v1678
    %v1775 = vpop.f32.mrb[0].mxu0
    %v1776 = vadd.f32 0.0, %v1775
    %v1777 = vpop.f32.mrb[0].mxu0
    %1778 = vmatprep.mubr.f32.mxu0 0.0
    %1779 = vmatmul.mubr.f32.gmra.mrb[0].mxu0 %v1680
    %v1780 = vpop.f32.mrb[0].mxu0
    %v1781 = vadd.f32 0.0, %v1780
    %v1782 = vpop.f32.mrb[0].mxu0
    %1783 = vmatprep.mubr.f32.mxu0 0.0
    %1784 = vmatmul.mubr.f32.gmra.mrb[0].mxu0 %v1682
    %v1785 = vpop.f32.mrb[0].mxu0
    %v1786 = vadd.f32 0.0, %v1785
    %v1787 = vpop.f32.mrb[0].mxu0
    %1788 = vdwg.mxu0
    %v1789 = vmul.f32 %v1751, 0.35355338
    %v1790 = vmul.f32 %v1756, 0.35355338
    %v1791 = vmul.f32 %v1761, 0.35355338
    %v1792 = vmul.f32 %v1766, 0.35355338
    %v1793 = vmul.f32 %v1771, 0.35355338
    %v1794 = vmul.f32 %v1776, 0.35355338
    %v1795 = vmul.f32 %v1781, 0.35355338
    %v1796 = vmul.f32 %v1786, 0.35355338
    %v1797 = vadd.f32 %v1789, %v303
    %v1798 = vadd.f32 %v1790, %v304
    %v1799 = vadd.f32 %v1791, %v305
    %v1800 = vadd.f32 %v1792, %v306
    %v1801 = vadd.f32 %v1793, %v307
    %v1802 = vadd.f32 %v1794, %v308
    %v1803 = vadd.f32 %v1795, %v309
    %v1804 = vadd.f32 %v1796, %v310
    %v1805 = vsel %vm647, %v1797, -inf
    %1806 = vmax.xlane.f32.xlu0 %v1805
    %v1807 = vpop.xlane.xlu0 %1806
    %v1808 = vsel %vm647, %v1798, -inf
    %1809 = vmax.xlane.f32.xlu0 %v1808
    %v1810 = vpop.xlane.xlu0 %1809
    %v1811 = vsel %vm647, %v1799, -inf
    %1812 = vmax.xlane.f32.xlu0 %v1811
    %v1813 = vpop.xlane.xlu0 %1812
    %v1814 = vsel %vm647, %v1800, -inf
    %1815 = vmax.xlane.f32.xlu0 %v1814
    %v1816 = vpop.xlane.xlu0 %1815
    %v1817 = vsel %vm647, %v1801, -inf
    %1818 = vmax.xlane.f32.xlu0 %v1817
    %v1819 = vpop.xlane.xlu0 %1818
    %v1820 = vsel %vm647, %v1802, -inf
    %1821 = vmax.xlane.f32.xlu0 %v1820
    %v1822 = vpop.xlane.xlu0 %1821
    %v1823 = vsel %vm647, %v1803, -inf
    %1824 = vmax.xlane.f32.xlu0 %v1823
    %v1825 = vpop.xlane.xlu0 %1824
    %v1826 = vsel %vm647, %v1804, -inf
    %1827 = vmax.xlane.f32.xlu0 %v1826
    %v1828 = vpop.xlane.xlu0 %1827
    %v1829 = vsub.f32 %v1797, %v1807
    %v1830 = vsub.f32 %v1798, %v1810
    %v1831 = vsub.f32 %v1799, %v1813
    %v1832 = vsub.f32 %v1800, %v1816
    %v1833 = vsub.f32 %v1801, %v1819
    %v1834 = vsub.f32 %v1802, %v1822
    %v1835 = vsub.f32 %v1803, %v1825
    %v1836 = vsub.f32 %v1804, %v1828
    %v1837 = vmul.f32 %v1829, 1.442695
    %v1838 = vpow.pop %v1837
    %v1839 = vmul.f32 %v1830, 1.442695
    %v1840 = vpow.pop %v1839
    %v1841 = vmul.f32 %v1831, 1.442695
    %v1842 = vpow.pop %v1841
    %v1843 = vmul.f32 %v1832, 1.442695
    %v1844 = vpow.pop %v1843
    %v1845 = vmul.f32 %v1833, 1.442695
    %v1846 = vpow.pop %v1845
    %v1847 = vmul.f32 %v1834, 1.442695
    %v1848 = vpow.pop %v1847
    %v1849 = vmul.f32 %v1835, 1.442695
    %v1850 = vpow.pop %v1849
    %v1851 = vmul.f32 %v1836, 1.442695
    %v1852 = vpow.pop %v1851
    %v1853 = vsel %vm647, %v1838, 0.0
    %1854 = vadd.xlane.f32.xlu0 %v1853
    %v1855 = vpop.xlane.xlu0 %1854
    %v1856 = vsel %vm647, %v1840, 0.0
    %1857 = vadd.xlane.f32.xlu0 %v1856
    %v1858 = vpop.xlane.xlu0 %1857
    %v1859 = vsel %vm647, %v1842, 0.0
    %1860 = vadd.xlane.f32.xlu0 %v1859
    %v1861 = vpop.xlane.xlu0 %1860
    %v1862 = vsel %vm647, %v1844, 0.0
    %1863 = vadd.xlane.f32.xlu0 %v1862
    %v1864 = vpop.xlane.xlu0 %1863
    %v1865 = vsel %vm647, %v1846, 0.0
    %1866 = vadd.xlane.f32.xlu0 %v1865
    %v1867 = vpop.xlane.xlu0 %1866
    %v1868 = vsel %vm647, %v1848, 0.0
    %1869 = vadd.xlane.f32.xlu0 %v1868
    %v1870 = vpop.xlane.xlu0 %1869
    %v1871 = vsel %vm647, %v1850, 0.0
    %1872 = vadd.xlane.f32.xlu0 %v1871
    %v1873 = vpop.xlane.xlu0 %1872
    %v1874 = vsel %vm647, %v1852, 0.0
    %1875 = vadd.xlane.f32.xlu0 %v1874
    %v1876 = vpop.xlane.xlu0 %1875
    %v1877 = vrcp.pop %v1855
    %v1878 = vrcp.pop %v1858
    %v1879 = vrcp.pop %v1861
    %v1880 = vrcp.pop %v1864
    %v1881 = vrcp.pop %v1867
    %v1882 = vrcp.pop %v1870
    %v1883 = vrcp.pop %v1873
    %v1884 = vrcp.pop %v1876
    %v1885 = vmul.f32 %v1838, %v1877
    %v1886 = vmul.f32 %v1840, %v1878
    %v1887 = vmul.f32 %v1842, %v1879
    %v1888 = vmul.f32 %v1844, %v1880
    %v1889 = vmul.f32 %v1846, %v1881
    %v1890 = vmul.f32 %v1848, %v1882
    %v1891 = vmul.f32 %v1850, %v1883
    %v1892 = vmul.f32 %v1852, %v1884
    %1893 = vrot.lane.b32.xlu0 %v1099, 96
    %v1894 = vpop.permute.xlu0 %1893
    %1895 = vrot.lane.b32.xlu0 %v1104, 96
    %v1896 = vpop.permute.xlu0 %1895
    %1897 = vrot.lane.b32.xlu0 %v1110, 96
    %v1898 = vpop.permute.xlu0 %1897
    %1899 = vrot.lane.b32.xlu0 %v1112, 96
    %v1900 = vpop.permute.xlu0 %1899
    %1901 = vrot.lane.b32.xlu0 %v1114, 96
    %v1902 = vpop.permute.xlu0 %1901
    %1903 = vrot.lane.b32.xlu0 %v1116, 96
    %v1904 = vpop.permute.xlu0 %1903
    %1905 = vrot.lane.b32.xlu0 %v1118, 96
    %v1906 = vpop.permute.xlu0 %1905
    %1907 = vrot.lane.b32.xlu0 %v1120, 96
    %v1908 = vpop.permute.xlu0 %1907
    %v1918 = vsel %vm647, %v1885, 0
    %v1921 = vsel %vm647, %v1886, 0
    %v1924 = vsel %vm647, %v1887, 0
    %v1927 = vsel %vm647, %v1888, 0
    %v1930 = vsel %vm647, %v1889, 0
    %v1933 = vsel %vm647, %v1890, 0
    %v1936 = vsel %vm647, %v1891, 0
    %v1939 = vsel %vm647, %v1892, 0
    %1941 = vmatprep.subr.mxu0 0.0
    %1942 = vmatpush1.msra.mxu0 %v1894
    %1943 = vmatprep.subr.mxu0 0.0
    %1944 = vmatpush1.msra.mxu0 %v1896
    %1945 = vmatprep.subr.mxu0 0.0
    %1946 = vmatpush1.msra.mxu0 %v1898
    %1947 = vmatprep.subr.mxu0 0.0
    %1948 = vmatpush1.msra.mxu0 %v1900
    %1949 = vmatprep.subr.mxu0 0.0
    %1950 = vmatpush1.msra.mxu0 %v1902
    %1951 = vmatprep.subr.mxu0 0.0
    %1952 = vmatpush1.msra.mxu0 %v1904
    %1953 = vmatprep.subr.mxu0 0.0
    %1954 = vmatpush1.msra.mxu0 %v1906
    %1955 = vmatprep.subr.mxu0 0.0
    %1956 = vmatpush1.msra.mxu0 %v1908
    %1957 = vmatprep.subr.mxu0 0.0
    %1958 = vmatpush1.msra.mxu0 0.0
    %1959 = vmatprep.subr.mxu0 0.0
    %1960 = vmatpush1.msra.mxu0 0.0
    %1961 = vmatprep.subr.mxu0 0.0
    %1962 = vmatpush1.msra.mxu0 0.0
    %1963 = vmatprep.subr.mxu0 0.0
    %1964 = vmatpush1.msra.mxu0 0.0
    %1965 = vmatprep.subr.mxu0 0.0
    %1966 = vmatpush1.msra.mxu0 0.0
    %1967 = vmatprep.subr.mxu0 0.0
    %1968 = vmatpush1.msra.mxu0 0.0
    %1969 = vmatprep.subr.mxu0 0.0
    %1970 = vmatpush1.msra.mxu0 0.0
    %1971 = vmatprep.subr.mxu0 0.0
    %1972 = vmatpush1.msra.mxu0 0.0
    %1973 = vmatprep.subr.mxu0 0.0
    %1974 = vmatpush1.msra.mxu0 0.0
    %1975 = vmatprep.subr.mxu0 0.0
    %1976 = vmatpush1.msra.mxu0 0.0
    %1977 = vmatprep.subr.mxu0 0.0
    %1978 = vmatpush1.msra.mxu0 0.0
    %1979 = vmatprep.subr.mxu0 0.0
    %1980 = vmatpush1.msra.mxu0 0.0
    %1981 = vmatprep.subr.mxu0 0.0
    %1982 = vmatpush1.msra.mxu0 0.0
    %1983 = vmatprep.subr.mxu0 0.0
    %1984 = vmatpush1.msra.mxu0 0.0
    %1985 = vmatprep.subr.mxu0 0.0
    %1986 = vmatpush1.msra.mxu0 0.0
    %1987 = vmatprep.subr.mxu0 0.0
    %1988 = vmatpush1.msra.mxu0 0.0
    %1989 = vmatprep.subr.mxu0 0.0
    %1990 = vmatpush1.msra.mxu0 0.0
    %1991 = vmatprep.subr.mxu0 0.0
    %1992 = vmatpush1.msra.mxu0 0.0
    %1993 = vmatprep.subr.mxu0 0.0
    %1994 = vmatpush1.msra.mxu0 0.0
    %1995 = vmatprep.subr.mxu0 0.0
    %1996 = vmatpush1.msra.mxu0 0.0
    %1997 = vmatprep.subr.mxu0 0.0
    %1998 = vmatpush1.msra.mxu0 0.0
    %1999 = vmatprep.subr.mxu0 0.0
    %2000 = vmatpush1.msra.mxu0 0.0
    %2001 = vmatprep.subr.mxu0 0.0
    %2002 = vmatpush1.msra.mxu0 0.0
    %2003 = vmatprep.subr.mxu0 0.0
    %2004 = vmatpush1.msra.mxu0 0.0
    %2005 = vmatprep.mubr.f32.mxu0 0.0
    %2006 = vmatmul.mubr.f32.gmra.mrb[0].mxu0 %v1918
    %v2007 = vpop.f32.mrb[0].mxu0
    %v2008 = vadd.f32 0.0, %v2007
    %v2009 = vpop.f32.mrb[0].mxu0
    %2010 = vmatprep.mubr.f32.mxu0 0.0
    %2011 = vmatmul.mubr.f32.gmra.mrb[0].mxu0 %v1921
    %v2012 = vpop.f32.mrb[0].mxu0
    %v2013 = vadd.f32 0.0, %v2012
    %v2014 = vpop.f32.mrb[0].mxu0
    %2015 = vmatprep.mubr.f32.mxu0 0.0
    %2016 = vmatmul.mubr.f32.gmra.mrb[0].mxu0 %v1924
    %v2017 = vpop.f32.mrb[0].mxu0
    %v2018 = vadd.f32 0.0, %v2017
    %v2019 = vpop.f32.mrb[0].mxu0
    %2020 = vmatprep.mubr.f32.mxu0 0.0
    %2021 = vmatmul.mubr.f32.gmra.mrb[0].mxu0 %v1927
    %v2022 = vpop.f32.mrb[0].mxu0
    %v2023 = vadd.f32 0.0, %v2022
    %v2024 = vpop.f32.mrb[0].mxu0
    %2025 = vmatprep.mubr.f32.mxu0 0.0
    %2026 = vmatmul.mubr.f32.gmra.mrb[0].mxu0 %v1930
    %v2027 = vpop.f32.mrb[0].mxu0
    %v2028 = vadd.f32 0.0, %v2027
    %v2029 = vpop.f32.mrb[0].mxu0
    %2030 = vmatprep.mubr.f32.mxu0 0.0
    %2031 = vmatmul.mubr.f32.gmra.mrb[0].mxu0 %v1933
    %v2032 = vpop.f32.mrb[0].mxu0
    %v2033 = vadd.f32 0.0, %v2032
    %v2034 = vpop.f32.mrb[0].mxu0
    %2035 = vmatprep.mubr.f32.mxu0 0.0
    %2036 = vmatmul.mubr.f32.gmra.mrb[0].mxu0 %v1936
    %v2037 = vpop.f32.mrb[0].mxu0
    %v2038 = vadd.f32 0.0, %v2037
    %v2039 = vpop.f32.mrb[0].mxu0
    %2040 = vmatprep.mubr.f32.mxu0 0.0
    %2041 = vmatmul.mubr.f32.gmra.mrb[0].mxu0 %v1939
    %v2042 = vpop.f32.mrb[0].mxu0
    %v2043 = vadd.f32 0.0, %v2042
    %v2044 = vpop.f32.mrb[0].mxu0
    %2045 = vdwg.mxu0
    %2048 = vrot.lane.b32.xlu0 %v2018, 8
    %v2049 = vpop.permute.xlu0 %2048
    %2050 = vrot.lane.b32.xlu0 %v2023, 8
    %v2051 = vpop.permute.xlu0 %2050
    %2056 = vrot.lane.b32.xlu0 %v2028, 16
    %v2057 = vpop.permute.xlu0 %2056
    %2058 = vrot.lane.b32.xlu0 %v2033, 16
    %v2059 = vpop.permute.xlu0 %2058
    %2064 = vrot.lane.b32.xlu0 %v2038, 24
    %v2065 = vpop.permute.xlu0 %2064
    %2066 = vrot.lane.b32.xlu0 %v2043, 24
    %v2067 = vpop.permute.xlu0 %2066
    %v2070 = vsel %vm493, %v2008, %v2049
    %v2071 = vsel %vm493, %v2013, %v2051
    %v2072 = vsel %vm915, %v2070, %v2057
    %v2073 = vsel %vm915, %v2071, %v2059
    %v2074 = vsel %vm918, %v2072, %v2065
    %v2075 = vsel %vm918, %v2073, %v2067
    %v2076 = vld [vmem:[#allocation26] sm:$0xff]
    %v2077 = vld [vmem:[#allocation26 + $0x8] sm:$0xff]
    %v2078 = vld [vmem:[#allocation26 + $0x10] sm:$0xff]
    %v2079 = vld [vmem:[#allocation26 + $0x18] sm:$0xff]
    %v2080 = vld [vmem:[%s19] sm:$0x1]
    %v2082 = vlaneseq
    %v2083 = vshrl.u32 %v2082, 7
    %v2084 = vsub.s32 0, %v2083
    %v2085 = vrot.slane %v2080, %v2084
    %v2088 = vsel %vm313, %v2074, 0
    %v2091 = vsel %vm313, %v2075, 0
    %2093 = vmatprep.subr.mxu0 0.0
    %2094 = vmatpush1.msra.mxu0 %v2076
    %2095 = vmatprep.subr.mxu0 0.0
    %2096 = vmatpush1.msra.mxu0 %v2077
    %2097 = vmatprep.subr.mxu0 0.0
    %2098 = vmatpush1.msra.mxu0 %v2078
    %2099 = vmatprep.subr.mxu0 0.0
    %2100 = vmatpush1.msra.mxu0 %v2079
    %2101 = vmatprep.subr.mxu0 0.0
    %2102 = vmatpush1.msra.mxu0 0.0
    %2103 = vmatprep.subr.mxu0 0.0
    %2104 = vmatpush1.msra.mxu0 0.0
    %2105 = vmatprep.subr.mxu0 0.0
    %2106 = vmatpush1.msra.mxu0 0.0
    %2107 = vmatprep.subr.mxu0 0.0
    %2108 = vmatpush1.msra.mxu0 0.0
    %2109 = vmatprep.subr.mxu0 0.0
    %2110 = vmatpush1.msra.mxu0 0.0
    %2111 = vmatprep.subr.mxu0 0.0
    %2112 = vmatpush1.msra.mxu0 0.0
    %2113 = vmatprep.subr.mxu0 0.0
    %2114 = vmatpush1.msra.mxu0 0.0
    %2115 = vmatprep.subr.mxu0 0.0
    %2116 = vmatpush1.msra.mxu0 0.0
    %2117 = vmatprep.subr.mxu0 0.0
    %2118 = vmatpush1.msra.mxu0 0.0
    %2119 = vmatprep.subr.mxu0 0.0
    %2120 = vmatpush1.msra.mxu0 0.0
    %2121 = vmatprep.subr.mxu0 0.0
    %2122 = vmatpush1.msra.mxu0 0.0
    %2123 = vmatprep.subr.mxu0 0.0
    %2124 = vmatpush1.msra.mxu0 0.0
    %2125 = vmatprep.subr.mxu0 0.0
    %2126 = vmatpush1.msra.mxu0 0.0
    %2127 = vmatprep.subr.mxu0 0.0
    %2128 = vmatpush1.msra.mxu0 0.0
    %2129 = vmatprep.subr.mxu0 0.0
    %2130 = vmatpush1.msra.mxu0 0.0
    %2131 = vmatprep.subr.mxu0 0.0
    %2132 = vmatpush1.msra.mxu0 0.0
    %2133 = vmatprep.subr.mxu0 0.0
    %2134 = vmatpush1.msra.mxu0 0.0
    %2135 = vmatprep.subr.mxu0 0.0
    %2136 = vmatpush1.msra.mxu0 0.0
    %2137 = vmatprep.subr.mxu0 0.0
    %2138 = vmatpush1.msra.mxu0 0.0
    %2139 = vmatprep.subr.mxu0 0.0
    %2140 = vmatpush1.msra.mxu0 0.0
    %2141 = vmatprep.subr.mxu0 0.0
    %2142 = vmatpush1.msra.mxu0 0.0
    %2143 = vmatprep.subr.mxu0 0.0
    %2144 = vmatpush1.msra.mxu0 0.0
    %2145 = vmatprep.subr.mxu0 0.0
    %2146 = vmatpush1.msra.mxu0 0.0
    %2147 = vmatprep.subr.mxu0 0.0
    %2148 = vmatpush1.msra.mxu0 0.0
    %2149 = vmatprep.subr.mxu0 0.0
    %2150 = vmatpush1.msra.mxu0 0.0
    %2151 = vmatprep.subr.mxu0 0.0
    %2152 = vmatpush1.msra.mxu0 0.0
    %2153 = vmatprep.subr.mxu0 0.0
    %2154 = vmatpush1.msra.mxu0 0.0
    %2155 = vmatprep.subr.mxu0 0.0
    %2156 = vmatpush1.msra.mxu0 0.0
    %2157 = vmatprep.mubr.f32.mxu0 0.0
    %2158 = vmatmul.mubr.f32.gmra.mrb[0].mxu0 %v2088
    %v2159 = vpop.f32.mrb[0].mxu0
    %v2160 = vadd.f32 %v2085, %v2159
    %v2161 = vpop.f32.mrb[0].mxu0
    %2162 = vmatprep.mubr.f32.mxu0 0.0
    %2163 = vmatmul.mubr.f32.gmra.mrb[0].mxu0 %v2091
    %v2164 = vpop.f32.mrb[0].mxu0
    %v2165 = vadd.f32 %v2085, %v2164
    %v2166 = vpop.f32.mrb[0].mxu0
    %2167 = vdwg.mxu0
    %v2168 = vadd.f32 %v1013, %v2160
    %v2169 = vadd.f32 %v1014, %v2165
    %v2170 = vld [vmem:[#allocation14] sm:$0x1]
    %v2171 = vld [vmem:[#allocation16] sm:$0x1]
    %v2172 = vsel %vm313, %v2168, 0.0
    %2173 = vadd.xlane.f32.xlu0 %v2172
    %v2174 = vpop.xlane.xlu0 %2173
    %v2175 = vsel %vm313, %v2169, 0.0
    %2176 = vadd.xlane.f32.xlu0 %v2175
    %v2177 = vpop.xlane.xlu0 %2176
    %v2178 = vmul.f32 %v2174, %v320
    %v2179 = vmul.f32 %v2177, %v320
    %v2180 = vsub.f32 %v2168, %v2178
    %v2181 = vsub.f32 %v2169, %v2179
    %v2182 = vmul.f32 %v2180, %v2180
    %v2183 = vmul.f32 %v2181, %v2181
    %v2184 = vsel %vm313, %v2182, 0.0
    %2185 = vadd.xlane.f32.xlu0 %v2184
    %v2186 = vpop.xlane.xlu0 %2185
    %v2187 = vsel %vm313, %v2183, 0.0
    %2188 = vadd.xlane.f32.xlu0 %v2187
    %v2189 = vpop.xlane.xlu0 %2188
    %v2190 = vmul.f32 %v2186, 0.032258064
    %v2191 = vmul.f32 %v2189, 0.032258064
    %v2192 = vrsqrt.pop %v2190
    %v2193 = vmul.f32 %v2190, %v2192
    %vm2194 = vcmp.eq.f32.partialorder %v2190, inf
    %v2195 = vsel %vm2194, %v2190, %v2193
    %vm2196 = vcmp.eq.f32.partialorder %v2190, 0.0
    %v2197 = vand.u32 %v2190, 2147483648
    %v2198 = vsel %vm2196, %v2197, %v2195
    %v2199 = vrsqrt.pop %v2191
    %v2200 = vmul.f32 %v2191, %v2199
    %vm2201 = vcmp.eq.f32.partialorder %v2191, inf
    %v2202 = vsel %vm2201, %v2191, %v2200
    %vm2203 = vcmp.eq.f32.partialorder %v2191, 0.0
    %v2204 = vand.u32 %v2191, 2147483648
    %v2205 = vsel %vm2203, %v2204, %v2202
    %v2206 = vadd.f32 %v2198, 1e-06
    %v2207 = vadd.f32 %v2205, 1e-06
    %v2208 = vrcp.pop %v2206
    %v2209 = vrcp.pop %v2207
    %v2211 = vlaneseq
    %v2212 = vshrl.u32 %v2211, 7
    %v2213 = vsub.s32 0, %v2212
    %v2214 = vrot.slane %v2170, %v2213
    %v2216 = vmul.f32 %v2214, %v2180
    %v2217 = vmul.f32 %v2214, %v2181
    %v2218 = vmul.f32 %v2216, %v2208
    %v2219 = vmul.f32 %v2217, %v2209
    %v2221 = vlaneseq
    %v2222 = vshrl.u32 %v2221, 7
    %v2223 = vsub.s32 0, %v2222
    %v2224 = vrot.slane %v2171, %v2223
    %v2226 = vadd.f32 %v2218, %v2224
    %v2227 = vadd.f32 %v2219, %v2224
    %v2228 = vld [vmem:[#allocation28] sm:$0xff]
    %v2229 = vld [vmem:[#allocation28 + $0x8] sm:$0xff]
    %v2230 = vld [vmem:[#allocation28 + $0x10] sm:$0xff]
    %v2231 = vld [vmem:[#allocation28 + $0x18] sm:$0xff]
    %v2232 = vld [vmem:[%s21] sm:$0x1]
    %v2234 = vlaneseq
    %v2235 = vshrl.u32 %v2234, 7
    %v2236 = vsub.s32 0, %v2235
    %v2237 = vrot.slane %v2232, %v2236
    %v2240 = vsel %vm313, %v2226, 0
    %v2243 = vsel %vm313, %v2227, 0
    %2245 = vmatprep.subr.mxu0 0.0
    %2246 = vmatpush1.msra.mxu0 %v2228
    %2247 = vmatprep.subr.mxu0 0.0
    %2248 = vmatpush1.msra.mxu0 %v2229
    %2249 = vmatprep.subr.mxu0 0.0
    %2250 = vmatpush1.msra.mxu0 %v2230
    %2251 = vmatprep.subr.mxu0 0.0
    %2252 = vmatpush1.msra.mxu0 %v2231
    %2253 = vmatprep.subr.mxu0 0.0
    %2254 = vmatpush1.msra.mxu0 0.0
    %2255 = vmatprep.subr.mxu0 0.0
    %2256 = vmatpush1.msra.mxu0 0.0
    %2257 = vmatprep.subr.mxu0 0.0
    %2258 = vmatpush1.msra.mxu0 0.0
    %2259 = vmatprep.subr.mxu0 0.0
    %2260 = vmatpush1.msra.mxu0 0.0
    %2261 = vmatprep.subr.mxu0 0.0
    %2262 = vmatpush1.msra.mxu0 0.0
    %2263 = vmatprep.subr.mxu0 0.0
    %2264 = vmatpush1.msra.mxu0 0.0
    %2265 = vmatprep.subr.mxu0 0.0
    %2266 = vmatpush1.msra.mxu0 0.0
    %2267 = vmatprep.subr.mxu0 0.0
    %2268 = vmatpush1.msra.mxu0 0.0
    %2269 = vmatprep.subr.mxu0 0.0
    %2270 = vmatpush1.msra.mxu0 0.0
    %2271 = vmatprep.subr.mxu0 0.0
    %2272 = vmatpush1.msra.mxu0 0.0
    %2273 = vmatprep.subr.mxu0 0.0
    %2274 = vmatpush1.msra.mxu0 0.0
    %2275 = vmatprep.subr.mxu0 0.0
    %2276 = vmatpush1.msra.mxu0 0.0
    %2277 = vmatprep.subr.mxu0 0.0
    %2278 = vmatpush1.msra.mxu0 0.0
    %2279 = vmatprep.subr.mxu0 0.0
    %2280 = vmatpush1.msra.mxu0 0.0
    %2281 = vmatprep.subr.mxu0 0.0
    %2282 = vmatpush1.msra.mxu0 0.0
    %2283 = vmatprep.subr.mxu0 0.0
    %2284 = vmatpush1.msra.mxu0 0.0
    %2285 = vmatprep.subr.mxu0 0.0
    %2286 = vmatpush1.msra.mxu0 0.0
    %2287 = vmatprep.subr.mxu0 0.0
    %2288 = vmatpush1.msra.mxu0 0.0
    %2289 = vmatprep.subr.mxu0 0.0
    %2290 = vmatpush1.msra.mxu0 0.0
    %2291 = vmatprep.subr.mxu0 0.0
    %2292 = vmatpush1.msra.mxu0 0.0
    %2293 = vmatprep.subr.mxu0 0.0
    %2294 = vmatpush1.msra.mxu0 0.0
    %2295 = vmatprep.subr.mxu0 0.0
    %2296 = vmatpush1.msra.mxu0 0.0
    %2297 = vmatprep.subr.mxu0 0.0
    %2298 = vmatpush1.msra.mxu0 0.0
    %2299 = vmatprep.subr.mxu0 0.0
    %2300 = vmatpush1.msra.mxu0 0.0
    %2301 = vmatprep.subr.mxu0 0.0
    %2302 = vmatpush1.msra.mxu0 0.0
    %2303 = vmatprep.subr.mxu0 0.0
    %2304 = vmatpush1.msra.mxu0 0.0
    %2305 = vmatprep.subr.mxu0 0.0
    %2306 = vmatpush1.msra.mxu0 0.0
    %2307 = vmatprep.subr.mxu0 0.0
    %2308 = vmatpush1.msra.mxu0 0.0
    %2309 = vmatprep.mubr.f32.mxu0 0.0
    %2310 = vmatmul.mubr.f32.gmra.mrb[0].mxu0 %v2240
    %v2311 = vpop.f32.mrb[0].mxu0
    %v2312 = vadd.f32 %v2237, %v2311
    %v2313 = vpop.f32.mrb[0].mxu0
    %2314 = vmatprep.mubr.f32.mxu0 0.0
    %2315 = vmatmul.mubr.f32.gmra.mrb[0].mxu0 %v2243
    %v2316 = vpop.f32.mrb[0].mxu0
    %v2317 = vadd.f32 %v2237, %v2316
    %v2318 = vpop.f32.mrb[0].mxu0
    %2319 = vdwg.mxu0
    %v2320 = vmax.f32 %v2312, 0.0
    %v2321 = vmax.f32 %v2317, 0.0
    %v2322 = vld [vmem:[%s22] sm:$0xff]
    %v2323 = vld [vmem:[%s22 + $0x8] sm:$0xff]
    %v2324 = vld [vmem:[%s22 + $0x10] sm:$0xff]
    %v2325 = vld [vmem:[%s22 + $0x18] sm:$0xff]
    %v2326 = vld [vmem:[%s22 + $0x20] sm:$0xff]
    %v2327 = vld [vmem:[%s22 + $0x28] sm:$0xff]
    %v2328 = vld [vmem:[%s22 + $0x30] sm:$0xff]
    %v2329 = vld [vmem:[%s22 + $0x38] sm:$0xff]
    %v2330 = vld [vmem:[%s23] sm:$0x1]
    %v2332 = vlaneseq
    %v2333 = vshrl.u32 %v2332, 7
    %v2334 = vsub.s32 0, %v2333
    %v2335 = vrot.slane %v2330, %v2334
    %v2338 = vsel %vm647, %v2320, 0
    %v2341 = vsel %vm647, %v2321, 0
    %2343 = vmatprep.subr.mxu0 0.0
    %2344 = vmatpush1.msra.mxu0 %v2322
    %2345 = vmatprep.subr.mxu0 0.0
    %2346 = vmatpush1.msra.mxu0 %v2323
    %2347 = vmatprep.subr.mxu0 0.0
    %2348 = vmatpush1.msra.mxu0 %v2324
    %2349 = vmatprep.subr.mxu0 0.0
    %2350 = vmatpush1.msra.mxu0 %v2325
    %2351 = vmatprep.subr.mxu0 0.0
    %2352 = vmatpush1.msra.mxu0 %v2326
    %2353 = vmatprep.subr.mxu0 0.0
    %2354 = vmatpush1.msra.mxu0 %v2327
    %2355 = vmatprep.subr.mxu0 0.0
    %2356 = vmatpush1.msra.mxu0 %v2328
    %2357 = vmatprep.subr.mxu0 0.0
    %2358 = vmatpush1.msra.mxu0 %v2329
    %2359 = vmatprep.subr.mxu0 0.0
    %2360 = vmatpush1.msra.mxu0 0.0
    %2361 = vmatprep.subr.mxu0 0.0
    %2362 = vmatpush1.msra.mxu0 0.0
    %2363 = vmatprep.subr.mxu0 0.0
    %2364 = vmatpush1.msra.mxu0 0.0
    %2365 = vmatprep.subr.mxu0 0.0
    %2366 = vmatpush1.msra.mxu0 0.0
    %2367 = vmatprep.subr.mxu0 0.0
    %2368 = vmatpush1.msra.mxu0 0.0
    %2369 = vmatprep.subr.mxu0 0.0
    %2370 = vmatpush1.msra.mxu0 0.0
    %2371 = vmatprep.subr.mxu0 0.0
    %2372 = vmatpush1.msra.mxu0 0.0
    %2373 = vmatprep.subr.mxu0 0.0
    %2374 = vmatpush1.msra.mxu0 0.0
    %2375 = vmatprep.subr.mxu0 0.0
    %2376 = vmatpush1.msra.mxu0 0.0
    %2377 = vmatprep.subr.mxu0 0.0
    %2378 = vmatpush1.msra.mxu0 0.0
    %2379 = vmatprep.subr.mxu0 0.0
    %2380 = vmatpush1.msra.mxu0 0.0
    %2381 = vmatprep.subr.mxu0 0.0
    %2382 = vmatpush1.msra.mxu0 0.0
    %2383 = vmatprep.subr.mxu0 0.0
    %2384 = vmatpush1.msra.mxu0 0.0
    %2385 = vmatprep.subr.mxu0 0.0
    %2386 = vmatpush1.msra.mxu0 0.0
    %2387 = vmatprep.subr.mxu0 0.0
    %2388 = vmatpush1.msra.mxu0 0.0
    %2389 = vmatprep.subr.mxu0 0.0
    %2390 = vmatpush1.msra.mxu0 0.0
    %2391 = vmatprep.subr.mxu0 0.0
    %2392 = vmatpush1.msra.mxu0 0.0
    %2393 = vmatprep.subr.mxu0 0.0
    %2394 = vmatpush1.msra.mxu0 0.0
    %2395 = vmatprep.subr.mxu0 0.0
    %2396 = vmatpush1.msra.mxu0 0.0
    %2397 = vmatprep.subr.mxu0 0.0
    %2398 = vmatpush1.msra.mxu0 0.0
    %2399 = vmatprep.subr.mxu0 0.0
    %2400 = vmatpush1.msra.mxu0 0.0
    %2401 = vmatprep.subr.mxu0 0.0
    %2402 = vmatpush1.msra.mxu0 0.0
    %2403 = vmatprep.subr.mxu0 0.0
    %2404 = vmatpush1.msra.mxu0 0.0
    %2405 = vmatprep.subr.mxu0 0.0
    %2406 = vmatpush1.msra.mxu0 0.0
    %2407 = vmatprep.mubr.f32.mxu0 0.0
    %2408 = vmatmul.mubr.f32.gmra.mrb[0].mxu0 %v2338
    %v2409 = vpop.f32.mrb[0].mxu0
    %v2410 = vadd.f32 %v2335, %v2409
    %v2411 = vpop.f32.mrb[0].mxu0
    %2412 = vmatprep.mubr.f32.mxu0 0.0
    %2413 = vmatmul.mubr.f32.gmra.mrb[0].mxu0 %v2341
    %v2414 = vpop.f32.mrb[0].mxu0
    %v2415 = vadd.f32 %v2335, %v2414
    %v2416 = vpop.f32.mrb[0].mxu0
    %2417 = vdwg.mxu0
    %v2418 = vadd.f32 %v2168, %v2410
    %v2419 = vadd.f32 %v2169, %v2415
    %2420 = vst.msk [vmem:[#allocation29] sm:$0xff] %vm313, %v2418
    %2421 = vst.msk [vmem:[#allocation29 + $0x8] sm:$0xff] %vm313, %v2419
    // Predicated region
    $region166: #{tpu_custom_call.1} parent=1 // pred_check
      _
    $region167: #{tpu_custom_call.1} parent=1 // pred_check_branch
      %2423 = sbr.rel (0) target = $region169
    $region168: #{tpu_custom_call.1} parent=1 // pred_region
      %s2425 = ssub.s32 256, 256
      %2426 = vsyncadd [#allocation4], %s2425
      %s2427 = sshll.u32 [#allocation29], 4
      %s2428 = int_to_ptr.vmem [resolvable:$true] %s2427
      %2433 = dma.vmem_to_hbm [thread:$0]  %s2428, 256, %s24, [#allocation4], 128, 128, 8
    $region169: #{tpu_custom_call.1} parent=1 // pred_fallthru
      _
    // Predicated region
    $region170: #{tpu_custom_call.1} parent=1 // pred_check
      _
    $region171: #{tpu_custom_call.1} parent=1 // pred_check_branch
      %2435 = sbr.rel (0) target = $region173
    $region172: #{tpu_custom_call.1} parent=1 // pred_region
      %s2437 = ssub.s32 256, 256
      %2438 = vsyncadd [#allocation31], %s2437
      %s2439 = sshll.u32 [#allocation30], 4
      %s2440 = int_to_ptr.vmem [resolvable:$true] %s2439
      %2445 = dma.vmem_to_hbm [thread:$0]  %s2440, 256, %s25, [#allocation31], 128, 128, 8
    $region173: #{tpu_custom_call.1} parent=1 // pred_fallthru
      _
    // Predicated region
    $region174: #{tpu_custom_call.1} parent=1 // pred_check
      _
    $region175: #{tpu_custom_call.1} parent=1 // pred_check_branch
      %2447 = sbr.rel (0) target = $region177
    $region176: #{tpu_custom_call.1} parent=1 // pred_region
      %2448 = dma.done [#allocation4], 256
    $region177: #{tpu_custom_call.1} parent=1 // pred_fallthru
      _
    // Predicated region
    $region178: #{tpu_custom_call.1} parent=1 // pred_check
      _
    $region179: #{tpu_custom_call.1} parent=1 // pred_check_branch
      %2450 = sbr.rel (0) target = $region181
    $region180: #{tpu_custom_call.1} parent=1 // pred_region
      %2451 = dma.done [#allocation31], 256
    $region181: #{tpu_custom_call.1} parent=1 // pred_fallthru
      _
    %2452 = vsyncpa [#allocation3], 1
    %2453 = vsyncpa [#allocation6], 1
    %2454 = vsyncpa [#allocation9], 1
    %2455 = vsyncpa [#allocation12], 1
    %2456 = vsyncpa [#allocation15], 1
    %2457 = vsyncpa [#allocation18], 1
    %2458 = vsyncpa [#allocation21], 1
    %2459 = vsyncpa [#allocation24], 1
    %2460 = vsyncpa [#allocation27], 1
    %2461 = vsyncpa [#allocation4], 1
    %2462 = vsyncpa [#allocation31], 1

</llo_original>
